<compile_context>
chip_gen: v7x
topology: tpu7x:2x2x1
jax: 0.10.0
libtpu: 0.0.40
codegen_flags: <defaults>
</compile_context>

<pallas_src>
import functools
import math

import jax
import jax.numpy as jnp
import numpy as np
from jax.experimental import pallas as pl
from jax.experimental.pallas import tpu as pltpu


def _mha_kernel(q_ref, k_ref, v_ref, w_ref, b_ref, out_ref, *, heads: int, d_k: int):
    # Single grid step: refs hold the whole batch.
    bs, S, D = q_ref.shape
    scale = 1.0 / math.sqrt(float(d_k))

    # Flatten (bs, S) onto sublanes; d_model stays in the lane dimension (leading-dim
    # collapse is a layout no-op).
    qx = q_ref[...].reshape(bs * S, D)
    kx = k_ref[...].reshape(bs * S, D)
    vx = v_ref[...].reshape(bs * S, D)

    # ---- Q/K/V projections: three full-lane-width (bs*S, D) @ (D, D) MXU pushes ----
    qp = jnp.dot(qx, w_ref[0], preferred_element_type=jnp.float32) + b_ref[0]
    kp = jnp.dot(kx, w_ref[1], preferred_element_type=jnp.float32) + b_ref[1]
    vp = jnp.dot(vx, w_ref[2], preferred_element_type=jnp.float32) + b_ref[2]

    # ---- Scaled dot-product attention; heads split logically via static lane slices ----
    head_outs = []
    for h in range(heads):                                   # unrolled, heads = 4
        lo = h * d_k
        q_h = qp[:, lo:lo + d_k].reshape(bs, S, d_k)
        k_h = kp[:, lo:lo + d_k].reshape(bs, S, d_k)
        v_h = vp[:, lo:lo + d_k].reshape(bs, S, d_k)

        s_h = jnp.einsum("bqd,bkd->bqk", q_h, k_h,
                         preferred_element_type=jnp.float32) * scale     # (bs, S, S)

        # Numerically stable softmax; reciprocal runs on the (otherwise idle) EUP slot.
        m_h = jnp.max(s_h, axis=-1, keepdims=True)
        e_h = jnp.exp(s_h - m_h)
        denom = jnp.sum(e_h, axis=-1, keepdims=True)
        p_h = e_h * pl.reciprocal(denom, approx=True)

        head_outs.append(jnp.einsum("bqk,bkd->bqd", p_h, v_h,
                                    preferred_element_type=jnp.float32))  # (bs, S, d_k)

    # ---- "concat": reassemble heads into d_model lanes, then ONE output matmul ----
    concat = jnp.concatenate(head_outs, axis=-1).reshape(bs * S, D)       # (bs*S, D)
    out = jnp.dot(concat, w_ref[3], preferred_element_type=jnp.float32) + b_ref[3]
    out_ref[...] = out.reshape(bs, S, D).astype(out_ref.dtype)


def multi_head_attention(q, k, v, params, *, heads: int):
    """q, k, v: (bs, seq, d_model) float32. params: PyTorch-style Linear weights/biases."""
    bs, seq, d_model = q.shape
    d_k = d_model // heads

    # One-time, wrapper-side weight plumbing. PyTorch Linear: y = x @ W.T + b with
    # W of shape (out, in) -> stack the transposed weights so the kernel does x @ W_p.
    w_stack = jnp.stack([params["wq"].T, params["wk"].T,
                         params["wv"].T, params["wo"].T], axis=0)          # (4, D, D)
    b_stack = jnp.stack([params["bq"], params["bk"],
                         params["bv"], params["bo"]], axis=0)[:, None, :]  # (4, 1, D)

    act_spec = pl.BlockSpec((bs, seq, d_model), lambda i: (0, 0, 0))
    w_spec = pl.BlockSpec((4, d_model, d_model), lambda i: (0, 0, 0))
    b_spec = pl.BlockSpec((4, 1, d_model), lambda i: (0, 0, 0))
    out_spec = pl.BlockSpec((bs, seq, d_model), lambda i: (0, 0, 0))

    kernel = functools.partial(_mha_kernel, heads=heads, d_k=d_k)

    return pl.pallas_call(
        kernel,
        out_shape=jax.ShapeDtypeStruct((bs, seq, d_model), q.dtype),
        grid_spec=pltpu.PrefetchScalarGridSpec(
            num_scalar_prefetch=0,
            grid=(1,),                               # single step: whole batch per step
            in_specs=[act_spec, act_spec, act_spec, w_spec, b_spec],
            out_specs=out_spec,
        ),
        compiler_params=pltpu.CompilerParams(
            dimension_semantics=("arbitrary",)),
    )(q, k, v, w_stack, b_stack)


def _reference(q, k, v, params, *, heads: int):
    """Pure-JAX reference matching the PyTorch forward exactly (exact softmax division)."""
    bs, seq, d_model = q.shape
    d_k = d_model // heads

    def lin(x, w, b):
        return x @ w.T + b

    qp = lin(q, params["wq"], params["bq"]).reshape(bs, seq, heads, d_k).transpose(0, 2, 1, 3)
    kp = lin(k, params["wk"], params["bk"]).reshape(bs, seq, heads, d_k).transpose(0, 2, 1, 3)
    vp = lin(v, params["wv"], params["bv"]).reshape(bs, seq, heads, d_k).transpose(0, 2, 1, 3)

    scores = jnp.einsum("bhqd,bhkd->bhqk", qp, kp) / jnp.sqrt(jnp.float32(d_k))
    scores = jax.nn.softmax(scores, axis=-1)
    out = jnp.einsum("bhqk,bhkd->bhqd", scores, vp)
    concat = out.transpose(0, 2, 1, 3).reshape(bs, seq, d_model)
    return lin(concat, params["wo"], params["bo"])


if __name__ == "__main__":
    bs, seq, d_model, heads = 2, 8, 32, 4

    key = jax.random.PRNGKey(0)
    keys = jax.random.split(key, 11)

    # Deterministic parameter init (PyTorch Linear convention: weight (out, in), bias (out,)).
    bound = 1.0 / math.sqrt(d_model)
    params = {
        "wq": jax.random.uniform(keys[0], (d_model, d_model), jnp.float32, -bound, bound),
        "bq": jax.random.uniform(keys[1], (d_model,), jnp.float32, -bound, bound),
        "wk": jax.random.uniform(keys[2], (d_model, d_model), jnp.float32, -bound, bound),
        "bk": jax.random.uniform(keys[3], (d_model,), jnp.float32, -bound, bound),
        "wv": jax.random.uniform(keys[4], (d_model, d_model), jnp.float32, -bound, bound),
        "bv": jax.random.uniform(keys[5], (d_model,), jnp.float32, -bound, bound),
        "wo": jax.random.uniform(keys[6], (d_model, d_model), jnp.float32, -bound, bound),
        "bo": jax.random.uniform(keys[7], (d_model,), jnp.float32, -bound, bound),
    }

    q = jax.random.normal(keys[8], (bs, seq, d_model), jnp.float32)
    k = jax.random.normal(keys[9], (bs, seq, d_model), jnp.float32)
    v = jax.random.normal(keys[10], (bs, seq, d_model), jnp.float32)

    out = multi_head_attention(q, k, v, params, heads=heads)
    out = jax.block_until_ready(out)

    ref = _reference(q, k, v, params, heads=heads)
    # Tolerance loosened vs the exact-division reference because the softmax denominator
    # uses the hardware approximate reciprocal (EUP, ~2^-12 relative error).
    np.testing.assert_allclose(np.asarray(out), np.asarray(ref), rtol=2e-3, atol=2e-3)

    print("KERNEL_OK")
</pallas_src>

<mosaic_0001>
module attributes {stable_mosaic.version = 11 : i64} {
  func.func @_mha_kernel(%arg0: i32, %arg1: memref<2x8x32xf32, #tpu.memory_space<vmem>>, %arg2: memref<2x8x32xf32, #tpu.memory_space<vmem>>, %arg3: memref<2x8x32xf32, #tpu.memory_space<vmem>>, %arg4: memref<4x32x32xf32, #tpu.memory_space<vmem>>, %arg5: memref<4x1x32xf32, #tpu.memory_space<vmem>>, %arg6: memref<2x8x32xf32, #tpu.memory_space<vmem>>) attributes {dimension_semantics = [#tpu.dimension_semantics<arbitrary>], iteration_bounds = array<i64: 1>, scalar_prefetch = 0 : i64, scratch_operands = 0 : i64, tpu.core_type = #tpu.core_type<tc>, window_params = [{pipeline_mode = #tpu.pipeline_mode<synchronous>, transform_indices = @transform_0, window_bounds = array<i64: 2, 8, 32>}, {pipeline_mode = #tpu.pipeline_mode<synchronous>, transform_indices = @transform_1, window_bounds = array<i64: 2, 8, 32>}, {pipeline_mode = #tpu.pipeline_mode<synchronous>, transform_indices = @transform_2, window_bounds = array<i64: 2, 8, 32>}, {pipeline_mode = #tpu.pipeline_mode<synchronous>, transform_indices = @transform_3, window_bounds = array<i64: 4, 32, 32>}, {pipeline_mode = #tpu.pipeline_mode<synchronous>, transform_indices = @transform_4, window_bounds = array<i64: 4, 1, 32>}, {pipeline_mode = #tpu.pipeline_mode<synchronous>, transform_indices = @transform_5, window_bounds = array<i64: 2, 8, 32>}]} {
    %c0 = arith.constant 0 : index
    %c0_0 = arith.constant 0 : index
    %c0_1 = arith.constant 0 : index
    %0 = vector.load %arg1[%c0, %c0_0, %c0_1] : memref<2x8x32xf32, #tpu.memory_space<vmem>>, vector<2x8x32xf32>
    %1 = vector.shape_cast %0 : vector<2x8x32xf32> to vector<16x32xf32>
    %c0_2 = arith.constant 0 : index
    %c0_3 = arith.constant 0 : index
    %c0_4 = arith.constant 0 : index
    %2 = vector.load %arg2[%c0_2, %c0_3, %c0_4] : memref<2x8x32xf32, #tpu.memory_space<vmem>>, vector<2x8x32xf32>
    %3 = vector.shape_cast %2 : vector<2x8x32xf32> to vector<16x32xf32>
    %c0_5 = arith.constant 0 : index
    %c0_6 = arith.constant 0 : index
    %c0_7 = arith.constant 0 : index
    %4 = vector.load %arg3[%c0_5, %c0_6, %c0_7] : memref<2x8x32xf32, #tpu.memory_space<vmem>>, vector<2x8x32xf32>
    %5 = vector.shape_cast %4 : vector<2x8x32xf32> to vector<16x32xf32>
    %c0_8 = arith.constant 0 : index
    %c0_9 = arith.constant 0 : index
    %c0_10 = arith.constant 0 : index
    %6 = vector.load %arg4[%c0_8, %c0_9, %c0_10] : memref<4x32x32xf32, #tpu.memory_space<vmem>>, vector<1x32x32xf32>
    %7 = vector.shape_cast %6 : vector<1x32x32xf32> to vector<32x32xf32>
    %cst = arith.constant dense<0.000000e+00> : vector<16x32xf32>
    %8 = tpu.matmul %1, %7, %cst {dimension_numbers = #tpu.dot_dimension_numbers<[1], [0], [0], [1], [0, 0, 1, 1], [], []>} : vector<16x32xf32>, vector<32x32xf32>, vector<16x32xf32> -> vector<16x32xf32>
    %c0_11 = arith.constant 0 : index
    %c0_12 = arith.constant 0 : index
    %c0_13 = arith.constant 0 : index
    %9 = vector.load %arg5[%c0_11, %c0_12, %c0_13] : memref<4x1x32xf32, #tpu.memory_space<vmem>>, vector<1x1x32xf32>
    %10 = vector.shape_cast %9 : vector<1x1x32xf32> to vector<1x32xf32>
    %11 = vector.broadcast %10 : vector<1x32xf32> to vector<16x32xf32>
    %12 = arith.addf %8, %11 : vector<16x32xf32>
    %c1 = arith.constant 1 : index
    %c0_14 = arith.constant 0 : index
    %c0_15 = arith.constant 0 : index
    %13 = vector.load %arg4[%c1, %c0_14, %c0_15] : memref<4x32x32xf32, #tpu.memory_space<vmem>>, vector<1x32x32xf32>
    %14 = vector.shape_cast %13 : vector<1x32x32xf32> to vector<32x32xf32>
    %cst_16 = arith.constant dense<0.000000e+00> : vector<16x32xf32>
    %15 = tpu.matmul %3, %14, %cst_16 {dimension_numbers = #tpu.dot_dimension_numbers<[1], [0], [0], [1], [0, 0, 1, 1], [], []>} : vector<16x32xf32>, vector<32x32xf32>, vector<16x32xf32> -> vector<16x32xf32>
    %c1_17 = arith.constant 1 : index
    %c0_18 = arith.constant 0 : index
    %c0_19 = arith.constant 0 : index
    %16 = vector.load %arg5[%c1_17, %c0_18, %c0_19] : memref<4x1x32xf32, #tpu.memory_space<vmem>>, vector<1x1x32xf32>
    %17 = vector.shape_cast %16 : vector<1x1x32xf32> to vector<1x32xf32>
    %18 = vector.broadcast %17 : vector<1x32xf32> to vector<16x32xf32>
    %19 = arith.addf %15, %18 : vector<16x32xf32>
    %c2 = arith.constant 2 : index
    %c0_20 = arith.constant 0 : index
    %c0_21 = arith.constant 0 : index
    %20 = vector.load %arg4[%c2, %c0_20, %c0_21] : memref<4x32x32xf32, #tpu.memory_space<vmem>>, vector<1x32x32xf32>
    %21 = vector.shape_cast %20 : vector<1x32x32xf32> to vector<32x32xf32>
    %cst_22 = arith.constant dense<0.000000e+00> : vector<16x32xf32>
    %22 = tpu.matmul %5, %21, %cst_22 {dimension_numbers = #tpu.dot_dimension_numbers<[1], [0], [0], [1], [0, 0, 1, 1], [], []>} : vector<16x32xf32>, vector<32x32xf32>, vector<16x32xf32> -> vector<16x32xf32>
    %c2_23 = arith.constant 2 : index
    %c0_24 = arith.constant 0 : index
    %c0_25 = arith.constant 0 : index
    %23 = vector.load %arg5[%c2_23, %c0_24, %c0_25] : memref<4x1x32xf32, #tpu.memory_space<vmem>>, vector<1x1x32xf32>
    %24 = vector.shape_cast %23 : vector<1x1x32xf32> to vector<1x32xf32>
    %25 = vector.broadcast %24 : vector<1x32xf32> to vector<16x32xf32>
    %26 = arith.addf %22, %25 : vector<16x32xf32>
    %27 = vector.extract_strided_slice %12 {offsets = [0, 0], sizes = [16, 8], strides = [1, 1]} : vector<16x32xf32> to vector<16x8xf32>
    %28 = vector.shape_cast %27 : vector<16x8xf32> to vector<2x8x8xf32>
    %29 = vector.extract_strided_slice %19 {offsets = [0, 0], sizes = [16, 8], strides = [1, 1]} : vector<16x32xf32> to vector<16x8xf32>
    %30 = vector.shape_cast %29 : vector<16x8xf32> to vector<2x8x8xf32>
    %31 = vector.extract_strided_slice %26 {offsets = [0, 0], sizes = [16, 8], strides = [1, 1]} : vector<16x32xf32> to vector<16x8xf32>
    %32 = vector.shape_cast %31 : vector<16x8xf32> to vector<2x8x8xf32>
    "tpu.trace_start"() <{level = 10 : i32, message = "bqd,bkd->bqk"}> : () -> ()
    %cst_26 = arith.constant dense<0.000000e+00> : vector<2x8x8xf32>
    %33 = tpu.matmul %28, %30, %cst_26 {dimension_numbers = #tpu.dot_dimension_numbers<[2], [2], [1], [1], [0, 0, 0, 1, 1, 1], [0], [0]>} : vector<2x8x8xf32>, vector<2x8x8xf32>, vector<2x8x8xf32> -> vector<2x8x8xf32>
    "tpu.trace_stop"() : () -> ()
    %cst_27 = arith.constant 0.353553385 : f32
    %34 = vector.broadcast %cst_27 : f32 to vector<2x8x8xf32>
    %35 = arith.mulf %33, %34 : vector<2x8x8xf32>
    %cst_28 = arith.constant dense<0xFF800000> : vector<2x8xf32>
    %36 = vector.multi_reduction <maximumf>, %35, %cst_28 [2] : vector<2x8x8xf32> to vector<2x8xf32>
    %37 = vector.shape_cast %36 : vector<2x8xf32> to vector<2x8x1xf32>
    %38 = vector.broadcast %37 : vector<2x8x1xf32> to vector<2x8x8xf32>
    %39 = arith.subf %35, %38 : vector<2x8x8xf32>
    %40 = math.exp %39 : vector<2x8x8xf32>
    %cst_29 = arith.constant dense<0.000000e+00> : vector<2x8xf32>
    %41 = vector.multi_reduction <add>, %40, %cst_29 [2] : vector<2x8x8xf32> to vector<2x8xf32>
    %42 = vector.shape_cast %41 : vector<2x8xf32> to vector<2x8x1xf32>
    %43 = tpu.reciprocal %42 {approx = true} : vector<2x8x1xf32> -> vector<2x8x1xf32>
    %44 = vector.broadcast %43 : vector<2x8x1xf32> to vector<2x8x8xf32>
    %45 = arith.mulf %40, %44 : vector<2x8x8xf32>
    "tpu.trace_start"() <{level = 10 : i32, message = "bqk,bkd->bqd"}> : () -> ()
    %cst_30 = arith.constant dense<0.000000e+00> : vector<2x8x8xf32>
    %46 = tpu.matmul %45, %32, %cst_30 {dimension_numbers = #tpu.dot_dimension_numbers<[2], [1], [1], [2], [0, 0, 0, 1, 1, 2], [0], [0]>} : vector<2x8x8xf32>, vector<2x8x8xf32>, vector<2x8x8xf32> -> vector<2x8x8xf32>
    "tpu.trace_stop"() : () -> ()
    %47 = vector.extract_strided_slice %12 {offsets = [0, 8], sizes = [16, 8], strides = [1, 1]} : vector<16x32xf32> to vector<16x8xf32>
    %48 = vector.shape_cast %47 : vector<16x8xf32> to vector<2x8x8xf32>
    %49 = vector.extract_strided_slice %19 {offsets = [0, 8], sizes = [16, 8], strides = [1, 1]} : vector<16x32xf32> to vector<16x8xf32>
    %50 = vector.shape_cast %49 : vector<16x8xf32> to vector<2x8x8xf32>
    %51 = vector.extract_strided_slice %26 {offsets = [0, 8], sizes = [16, 8], strides = [1, 1]} : vector<16x32xf32> to vector<16x8xf32>
    %52 = vector.shape_cast %51 : vector<16x8xf32> to vector<2x8x8xf32>
    "tpu.trace_start"() <{level = 10 : i32, message = "bqd,bkd->bqk"}> : () -> ()
    %cst_31 = arith.constant dense<0.000000e+00> : vector<2x8x8xf32>
    %53 = tpu.matmul %48, %50, %cst_31 {dimension_numbers = #tpu.dot_dimension_numbers<[2], [2], [1], [1], [0, 0, 0, 1, 1, 1], [0], [0]>} : vector<2x8x8xf32>, vector<2x8x8xf32>, vector<2x8x8xf32> -> vector<2x8x8xf32>
    "tpu.trace_stop"() : () -> ()
    %cst_32 = arith.constant 0.353553385 : f32
    %54 = vector.broadcast %cst_32 : f32 to vector<2x8x8xf32>
    %55 = arith.mulf %53, %54 : vector<2x8x8xf32>
    %cst_33 = arith.constant dense<0xFF800000> : vector<2x8xf32>
    %56 = vector.multi_reduction <maximumf>, %55, %cst_33 [2] : vector<2x8x8xf32> to vector<2x8xf32>
    %57 = vector.shape_cast %56 : vector<2x8xf32> to vector<2x8x1xf32>
    %58 = vector.broadcast %57 : vector<2x8x1xf32> to vector<2x8x8xf32>
    %59 = arith.subf %55, %58 : vector<2x8x8xf32>
    %60 = math.exp %59 : vector<2x8x8xf32>
    %cst_34 = arith.constant dense<0.000000e+00> : vector<2x8xf32>
    %61 = vector.multi_reduction <add>, %60, %cst_34 [2] : vector<2x8x8xf32> to vector<2x8xf32>
    %62 = vector.shape_cast %61 : vector<2x8xf32> to vector<2x8x1xf32>
    %63 = tpu.reciprocal %62 {approx = true} : vector<2x8x1xf32> -> vector<2x8x1xf32>
    %64 = vector.broadcast %63 : vector<2x8x1xf32> to vector<2x8x8xf32>
    %65 = arith.mulf %60, %64 : vector<2x8x8xf32>
    "tpu.trace_start"() <{level = 10 : i32, message = "bqk,bkd->bqd"}> : () -> ()
    %cst_35 = arith.constant dense<0.000000e+00> : vector<2x8x8xf32>
    %66 = tpu.matmul %65, %52, %cst_35 {dimension_numbers = #tpu.dot_dimension_numbers<[2], [1], [1], [2], [0, 0, 0, 1, 1, 2], [0], [0]>} : vector<2x8x8xf32>, vector<2x8x8xf32>, vector<2x8x8xf32> -> vector<2x8x8xf32>
    "tpu.trace_stop"() : () -> ()
    %67 = vector.extract_strided_slice %12 {offsets = [0, 16], sizes = [16, 8], strides = [1, 1]} : vector<16x32xf32> to vector<16x8xf32>
    %68 = vector.shape_cast %67 : vector<16x8xf32> to vector<2x8x8xf32>
    %69 = vector.extract_strided_slice %19 {offsets = [0, 16], sizes = [16, 8], strides = [1, 1]} : vector<16x32xf32> to vector<16x8xf32>
    %70 = vector.shape_cast %69 : vector<16x8xf32> to vector<2x8x8xf32>
    %71 = vector.extract_strided_slice %26 {offsets = [0, 16], sizes = [16, 8], strides = [1, 1]} : vector<16x32xf32> to vector<16x8xf32>
    %72 = vector.shape_cast %71 : vector<16x8xf32> to vector<2x8x8xf32>
    "tpu.trace_start"() <{level = 10 : i32, message = "bqd,bkd->bqk"}> : () -> ()
    %cst_36 = arith.constant dense<0.000000e+00> : vector<2x8x8xf32>
    %73 = tpu.matmul %68, %70, %cst_36 {dimension_numbers = #tpu.dot_dimension_numbers<[2], [2], [1], [1], [0, 0, 0, 1, 1, 1], [0], [0]>} : vector<2x8x8xf32>, vector<2x8x8xf32>, vector<2x8x8xf32> -> vector<2x8x8xf32>
    "tpu.trace_stop"() : () -> ()
    %cst_37 = arith.constant 0.353553385 : f32
    %74 = vector.broadcast %cst_37 : f32 to vector<2x8x8xf32>
    %75 = arith.mulf %73, %74 : vector<2x8x8xf32>
    %cst_38 = arith.constant dense<0xFF800000> : vector<2x8xf32>
    %76 = vector.multi_reduction <maximumf>, %75, %cst_38 [2] : vector<2x8x8xf32> to vector<2x8xf32>
    %77 = vector.shape_cast %76 : vector<2x8xf32> to vector<2x8x1xf32>
    %78 = vector.broadcast %77 : vector<2x8x1xf32> to vector<2x8x8xf32>
    %79 = arith.subf %75, %78 : vector<2x8x8xf32>
    %80 = math.exp %79 : vector<2x8x8xf32>
    %cst_39 = arith.constant dense<0.000000e+00> : vector<2x8xf32>
    %81 = vector.multi_reduction <add>, %80, %cst_39 [2] : vector<2x8x8xf32> to vector<2x8xf32>
    %82 = vector.shape_cast %81 : vector<2x8xf32> to vector<2x8x1xf32>
    %83 = tpu.reciprocal %82 {approx = true} : vector<2x8x1xf32> -> vector<2x8x1xf32>
    %84 = vector.broadcast %83 : vector<2x8x1xf32> to vector<2x8x8xf32>
    %85 = arith.mulf %80, %84 : vector<2x8x8xf32>
    "tpu.trace_start"() <{level = 10 : i32, message = "bqk,bkd->bqd"}> : () -> ()
    %cst_40 = arith.constant dense<0.000000e+00> : vector<2x8x8xf32>
    %86 = tpu.matmul %85, %72, %cst_40 {dimension_numbers = #tpu.dot_dimension_numbers<[2], [1], [1], [2], [0, 0, 0, 1, 1, 2], [0], [0]>} : vector<2x8x8xf32>, vector<2x8x8xf32>, vector<2x8x8xf32> -> vector<2x8x8xf32>
    "tpu.trace_stop"() : () -> ()
    %87 = vector.extract_strided_slice %12 {offsets = [0, 24], sizes = [16, 8], strides = [1, 1]} : vector<16x32xf32> to vector<16x8xf32>
    %88 = vector.shape_cast %87 : vector<16x8xf32> to vector<2x8x8xf32>
    %89 = vector.extract_strided_slice %19 {offsets = [0, 24], sizes = [16, 8], strides = [1, 1]} : vector<16x32xf32> to vector<16x8xf32>
    %90 = vector.shape_cast %89 : vector<16x8xf32> to vector<2x8x8xf32>
    %91 = vector.extract_strided_slice %26 {offsets = [0, 24], sizes = [16, 8], strides = [1, 1]} : vector<16x32xf32> to vector<16x8xf32>
    %92 = vector.shape_cast %91 : vector<16x8xf32> to vector<2x8x8xf32>
    "tpu.trace_start"() <{level = 10 : i32, message = "bqd,bkd->bqk"}> : () -> ()
    %cst_41 = arith.constant dense<0.000000e+00> : vector<2x8x8xf32>
    %93 = tpu.matmul %88, %90, %cst_41 {dimension_numbers = #tpu.dot_dimension_numbers<[2], [2], [1], [1], [0, 0, 0, 1, 1, 1], [0], [0]>} : vector<2x8x8xf32>, vector<2x8x8xf32>, vector<2x8x8xf32> -> vector<2x8x8xf32>
    "tpu.trace_stop"() : () -> ()
    %cst_42 = arith.constant 0.353553385 : f32
    %94 = vector.broadcast %cst_42 : f32 to vector<2x8x8xf32>
    %95 = arith.mulf %93, %94 : vector<2x8x8xf32>
    %cst_43 = arith.constant dense<0xFF800000> : vector<2x8xf32>
    %96 = vector.multi_reduction <maximumf>, %95, %cst_43 [2] : vector<2x8x8xf32> to vector<2x8xf32>
    %97 = vector.shape_cast %96 : vector<2x8xf32> to vector<2x8x1xf32>
    %98 = vector.broadcast %97 : vector<2x8x1xf32> to vector<2x8x8xf32>
    %99 = arith.subf %95, %98 : vector<2x8x8xf32>
    %100 = math.exp %99 : vector<2x8x8xf32>
    %cst_44 = arith.constant dense<0.000000e+00> : vector<2x8xf32>
    %101 = vector.multi_reduction <add>, %100, %cst_44 [2] : vector<2x8x8xf32> to vector<2x8xf32>
    %102 = vector.shape_cast %101 : vector<2x8xf32> to vector<2x8x1xf32>
    %103 = tpu.reciprocal %102 {approx = true} : vector<2x8x1xf32> -> vector<2x8x1xf32>
    %104 = vector.broadcast %103 : vector<2x8x1xf32> to vector<2x8x8xf32>
    %105 = arith.mulf %100, %104 : vector<2x8x8xf32>
    "tpu.trace_start"() <{level = 10 : i32, message = "bqk,bkd->bqd"}> : () -> ()
    %cst_45 = arith.constant dense<0.000000e+00> : vector<2x8x8xf32>
    %106 = tpu.matmul %105, %92, %cst_45 {dimension_numbers = #tpu.dot_dimension_numbers<[2], [1], [1], [2], [0, 0, 0, 1, 1, 2], [0], [0]>} : vector<2x8x8xf32>, vector<2x8x8xf32>, vector<2x8x8xf32> -> vector<2x8x8xf32>
    "tpu.trace_stop"() : () -> ()
    %107 = tpu.concatenate %46, %66, %86, %106 in 2 : vector<2x8x8xf32>, vector<2x8x8xf32>, vector<2x8x8xf32>, vector<2x8x8xf32> -> vector<2x8x32xf32>
    %108 = vector.shape_cast %107 : vector<2x8x32xf32> to vector<16x32xf32>
    %c3 = arith.constant 3 : index
    %c0_46 = arith.constant 0 : index
    %c0_47 = arith.constant 0 : index
    %109 = vector.load %arg4[%c3, %c0_46, %c0_47] : memref<4x32x32xf32, #tpu.memory_space<vmem>>, vector<1x32x32xf32>
    %110 = vector.shape_cast %109 : vector<1x32x32xf32> to vector<32x32xf32>
    %cst_48 = arith.constant dense<0.000000e+00> : vector<16x32xf32>
    %111 = tpu.matmul %108, %110, %cst_48 {dimension_numbers = #tpu.dot_dimension_numbers<[1], [0], [0], [1], [0, 0, 1, 1], [], []>} : vector<16x32xf32>, vector<32x32xf32>, vector<16x32xf32> -> vector<16x32xf32>
    %c3_49 = arith.constant 3 : index
    %c0_50 = arith.constant 0 : index
    %c0_51 = arith.constant 0 : index
    %112 = vector.load %arg5[%c3_49, %c0_50, %c0_51] : memref<4x1x32xf32, #tpu.memory_space<vmem>>, vector<1x1x32xf32>
    %113 = vector.shape_cast %112 : vector<1x1x32xf32> to vector<1x32xf32>
    %114 = vector.broadcast %113 : vector<1x32xf32> to vector<16x32xf32>
    %115 = arith.addf %111, %114 : vector<16x32xf32>
    %116 = vector.shape_cast %115 : vector<16x32xf32> to vector<2x8x32xf32>
    %c0_52 = arith.constant 0 : index
    %c0_53 = arith.constant 0 : index
    %c0_54 = arith.constant 0 : index
    %117 = vector.load %arg6[%c0_52, %c0_53, %c0_54] : memref<2x8x32xf32, #tpu.memory_space<vmem>>, vector<2x8x32xf32>
    tpu.vector_store %arg6[%c0_52, %c0_53, %c0_54], %116 {strides = array<i32>} : memref<2x8x32xf32, #tpu.memory_space<vmem>>, vector<2x8x32xf32>,
    return
  }
  func.func @transform_0(%arg0: i32) -> (i32, i32, i32) {
    %c0_i32 = arith.constant 0 : i32
    %c0_i32_0 = arith.constant 0 : i32
    %c0_i32_1 = arith.constant 0 : i32
    %c0_i32_2 = arith.constant 0 : i32
    return %c0_i32, %c0_i32_0, %c0_i32_1 : i32, i32, i32
  }
  func.func @transform_1(%arg0: i32) -> (i32, i32, i32) {
    %c0_i32 = arith.constant 0 : i32
    %c0_i32_0 = arith.constant 0 : i32
    %c0_i32_1 = arith.constant 0 : i32
    %c0_i32_2 = arith.constant 0 : i32
    return %c0_i32, %c0_i32_0, %c0_i32_1 : i32, i32, i32
  }
  func.func @transform_2(%arg0: i32) -> (i32, i32, i32) {
    %c0_i32 = arith.constant 0 : i32
    %c0_i32_0 = arith.constant 0 : i32
    %c0_i32_1 = arith.constant 0 : i32
    %c0_i32_2 = arith.constant 0 : i32
    return %c0_i32, %c0_i32_0, %c0_i32_1 : i32, i32, i32
  }
  func.func @transform_3(%arg0: i32) -> (i32, i32, i32) {
    %c0_i32 = arith.constant 0 : i32
    %c0_i32_0 = arith.constant 0 : i32
    %c0_i32_1 = arith.constant 0 : i32
    %c0_i32_2 = arith.constant 0 : i32
    return %c0_i32, %c0_i32_0, %c0_i32_1 : i32, i32, i32
  }
  func.func @transform_4(%arg0: i32) -> (i32, i32, i32) {
    %c0_i32 = arith.constant 0 : i32
    %c0_i32_0 = arith.constant 0 : i32
    %c0_i32_1 = arith.constant 0 : i32
    %c0_i32_2 = arith.constant 0 : i32
    return %c0_i32, %c0_i32_0, %c0_i32_1 : i32, i32, i32
  }
  func.func @transform_5(%arg0: i32) -> (i32, i32, i32) {
    %c0_i32 = arith.constant 0 : i32
    %c0_i32_0 = arith.constant 0 : i32
    %c0_i32_1 = arith.constant 0 : i32
    %c0_i32_2 = arith.constant 0 : i32
    return %c0_i32, %c0_i32_0, %c0_i32_1 : i32, i32, i32
  }
}

</mosaic_0001>

<llo_original>
// kernel: tpu_custom_call.1
$region0: #{tpu_custom_call.1}
  #allocation0 [shape = 'u32[]', space=smem, size = 0x4, offset = 0x4, fixed_abs, tag = 'smem constant byte address 0x4 - core index']
  #allocation1 [shape = 'u32[144,128]{1,0:T(1,128)}', space=vmem, size = 0x12000, scoped, tag = 'internal scratch']
  %s0 = inlined_call_operand.hbm [shape: f32[2,8,32], index: 0, kind: input, shape index: {}]
  %s1 = inlined_call_operand.hbm [shape: f32[2,8,32], index: 1, kind: input, shape index: {}]
  %s2 = inlined_call_operand.hbm [shape: f32[2,8,32], index: 2, kind: input, shape index: {}]
  %s3 = inlined_call_operand.hbm [shape: f32[4,32,32], index: 3, kind: input, shape index: {}]
  %s4 = inlined_call_operand.vmem [shape: f32[4,1,32], index: 4, kind: input, shape index: {}]
  %s5 = inlined_call_operand.hbm [shape: f32[2,8,32], index: 5, kind: output, shape index: {}]
  %s6 = sld [smem:[#allocation0]]
  $region46: #{tpu_custom_call.1} parent=0
    _
  %s8 = ssub.s32 1, %s6
  %s9 = scalar_select 0, %s8, %s6
  $region1: #{tpu_custom_call.1} parent=0
    #allocation2 [shape = 'u8[8192]{0}', space=vmem, size = 0x2000, scoped, tag = 'input window, operand 0, single buffered']
    #allocation3 [shape = 's32[1]{0}', space=sflag, size = 0x4, scoped, tag = 'scoped memory for tpu_custom_call.1']
    #allocation4 [shape = 's32[1]{0}', space=sflag, size = 0x4, scoped, tag = 'scoped memory for tpu_custom_call.1']
    #allocation5 [shape = 'u8[8192]{0}', space=vmem, size = 0x2000, scoped, tag = 'input window, operand 1, single buffered']
    #allocation6 [shape = 's32[1]{0}', space=sflag, size = 0x4, scoped, tag = 'scoped memory for tpu_custom_call.1']
    #allocation7 [shape = 'u8[8192]{0}', space=vmem, size = 0x2000, scoped, tag = 'input window, operand 2, single buffered']
    #allocation8 [shape = 'u8[65536]{0}', space=vmem, size = 0x10000, scoped, tag = 'input window, operand 3, single buffered']
    #allocation9 [shape = 's32[1]{0}', space=sflag, size = 0x4, scoped, tag = 'scoped memory for tpu_custom_call.1']
    #allocation10 [shape = 'u8[8192]{0}', space=vmem, size = 0x2000, scoped, tag = 'output window, operand 0, single buffered']
    %10 = vsyncpa [#allocation3], 0
    %11 = vsyncpa [#allocation6], 0
    %12 = vsyncpa [#allocation9], 0
    %13 = vsyncpa [#allocation4], 0
    // Predicated region
    $region2: #{tpu_custom_call.1} parent=1 // pred_check
      _
    $region3: #{tpu_custom_call.1} parent=1 // pred_check_branch
      %15 = sbr.rel (0) target = $region5
    $region4: #{tpu_custom_call.1} parent=1 // pred_region
      %s17 = ssub.s32 256, 256
      %18 = vsyncadd [#allocation3], %s17
      %s19 = sshll.u32 [#allocation2], 4
      %s20 = int_to_ptr.vmem [resolvable:$true] %s19
      %25 = dma.hbm_to_vmem [thread:$0]  %s0, 256, %s20, [#allocation3], 128, 128, 8
    $region5: #{tpu_custom_call.1} parent=1 // pred_fallthru
      _
    // Predicated region
    $region6: #{tpu_custom_call.1} parent=1 // pred_check
      _
    $region7: #{tpu_custom_call.1} parent=1 // pred_check_branch
      %27 = sbr.rel (0) target = $region9
    $region8: #{tpu_custom_call.1} parent=1 // pred_region
      %s29 = ssub.s32 256, 256
      %30 = vsyncadd [#allocation6], %s29
      %s31 = sshll.u32 [#allocation5], 4
      %s32 = int_to_ptr.vmem [resolvable:$true] %s31
      %37 = dma.hbm_to_vmem [thread:$0]  %s1, 256, %s32, [#allocation6], 128, 128, 8
    $region9: #{tpu_custom_call.1} parent=1 // pred_fallthru
      _
    // Predicated region
    $region10: #{tpu_custom_call.1} parent=1 // pred_check
      _
    $region11: #{tpu_custom_call.1} parent=1 // pred_check_branch
      %39 = sbr.rel (0) target = $region13
    $region12: #{tpu_custom_call.1} parent=1 // pred_region
      %s41 = ssub.s32 256, 256
      %42 = vsyncadd [#allocation6], %s41
      %s43 = sshll.u32 [#allocation7], 4
      %s44 = int_to_ptr.vmem [resolvable:$true] %s43
      %49 = dma.hbm_to_vmem [thread:$0]  %s2, 256, %s44, [#allocation6], 128, 128, 8
    $region13: #{tpu_custom_call.1} parent=1 // pred_fallthru
      _
    // Predicated region
    $region14: #{tpu_custom_call.1} parent=1 // pred_check
      _
    $region15: #{tpu_custom_call.1} parent=1 // pred_check_branch
      %51 = sbr.rel (0) target = $region17
    $region16: #{tpu_custom_call.1} parent=1 // pred_region
      %s53 = ssub.s32 2048, 2048
      %54 = vsyncadd [#allocation9], %s53
      %s55 = sshll.u32 [#allocation8], 4
      %s56 = int_to_ptr.vmem [resolvable:$true] %s55
      %61 = dma.hbm_to_vmem [thread:$0]  %s3, 2048, %s56, [#allocation9], 128, 128, 8
    $region17: #{tpu_custom_call.1} parent=1 // pred_fallthru
      _
    // Predicated region
    $region18: #{tpu_custom_call.1} parent=1 // pred_check
      _
    $region19: #{tpu_custom_call.1} parent=1 // pred_check_branch
      %63 = sbr.rel (0) target = $region21
    $region20: #{tpu_custom_call.1} parent=1 // pred_region
      _
    $region21: #{tpu_custom_call.1} parent=1 // pred_fallthru
      _
    // Predicated region
    $region22: #{tpu_custom_call.1} parent=1 // pred_check
      _
    $region23: #{tpu_custom_call.1} parent=1 // pred_check_branch
      %65 = sbr.rel (0) target = $region25
    $region24: #{tpu_custom_call.1} parent=1 // pred_region
      %66 = dma.done [#allocation3], 256
    $region25: #{tpu_custom_call.1} parent=1 // pred_fallthru
      _
    // Predicated region
    $region26: #{tpu_custom_call.1} parent=1 // pred_check
      _
    $region27: #{tpu_custom_call.1} parent=1 // pred_check_branch
      %68 = sbr.rel (0) target = $region29
    $region28: #{tpu_custom_call.1} parent=1 // pred_region
      %69 = dma.done [#allocation6], 256
    $region29: #{tpu_custom_call.1} parent=1 // pred_fallthru
      _
    // Predicated region
    $region30: #{tpu_custom_call.1} parent=1 // pred_check
      _
    $region31: #{tpu_custom_call.1} parent=1 // pred_check_branch
      %71 = sbr.rel (0) target = $region33
    $region32: #{tpu_custom_call.1} parent=1 // pred_region
      %72 = dma.done [#allocation6], 256
    $region33: #{tpu_custom_call.1} parent=1 // pred_fallthru
      _
    // Predicated region
    $region34: #{tpu_custom_call.1} parent=1 // pred_check
      _
    $region35: #{tpu_custom_call.1} parent=1 // pred_check_branch
      %74 = sbr.rel (0) target = $region37
    $region36: #{tpu_custom_call.1} parent=1 // pred_region
      %75 = dma.done [#allocation9], 2048
    $region37: #{tpu_custom_call.1} parent=1 // pred_fallthru
      _
    %v76 = vld [vmem:[#allocation2] sm:$0xff]
    %v77 = vld [vmem:[#allocation2 + $0x8] sm:$0xff]
    %v78 = vld [vmem:[#allocation5] sm:$0xff]
    %v79 = vld [vmem:[#allocation5 + $0x8] sm:$0xff]
    %v80 = vld [vmem:[#allocation7] sm:$0xff]
    %v81 = vld [vmem:[#allocation7 + $0x8] sm:$0xff]
    %v82 = vld [vmem:[#allocation8] sm:$0xff]
    %v83 = vld [vmem:[#allocation8 + $0x8] sm:$0xff]
    %v84 = vld [vmem:[#allocation8 + $0x10] sm:$0xff]
    %v85 = vld [vmem:[#allocation8 + $0x18] sm:$0xff]
    %v86 = vld [vmem:[%s4] sm:$0x1]
    %v88 = vlaneseq
    %v89 = vshrl.u32 %v88, 7
    %v90 = vsub.s32 0, %v89
    %v91 = vrot.slane %v86, %v90
    %vm93 = vcmask 261120
    %v95 = vsel %vm93, %v76, 0
    %v98 = vsel %vm93, %v77, 0
    %100 = vmatprep.subr.mxu0 0.0
    %101 = vmatpush1.msra.mxu0 %v82
    %102 = vmatprep.subr.mxu0 0.0
    %103 = vmatpush1.msra.mxu0 %v83
    %104 = vmatprep.subr.mxu0 0.0
    %105 = vmatpush1.msra.mxu0 %v84
    %106 = vmatprep.subr.mxu0 0.0
    %107 = vmatpush1.msra.mxu0 %v85
    %108 = vmatprep.subr.mxu0 0.0
    %109 = vmatpush1.msra.mxu0 0.0
    %110 = vmatprep.subr.mxu0 0.0
    %111 = vmatpush1.msra.mxu0 0.0
    %112 = vmatprep.subr.mxu0 0.0
    %113 = vmatpush1.msra.mxu0 0.0
    %114 = vmatprep.subr.mxu0 0.0
    %115 = vmatpush1.msra.mxu0 0.0
    %116 = vmatprep.subr.mxu0 0.0
    %117 = vmatpush1.msra.mxu0 0.0
    %118 = vmatprep.subr.mxu0 0.0
    %119 = vmatpush1.msra.mxu0 0.0
    %120 = vmatprep.subr.mxu0 0.0
    %121 = vmatpush1.msra.mxu0 0.0
    %122 = vmatprep.subr.mxu0 0.0
    %123 = vmatpush1.msra.mxu0 0.0
    %124 = vmatprep.subr.mxu0 0.0
    %125 = vmatpush1.msra.mxu0 0.0
    %126 = vmatprep.subr.mxu0 0.0
    %127 = vmatpush1.msra.mxu0 0.0
    %128 = vmatprep.subr.mxu0 0.0
    %129 = vmatpush1.msra.mxu0 0.0
    %130 = vmatprep.subr.mxu0 0.0
    %131 = vmatpush1.msra.mxu0 0.0
    %132 = vmatprep.subr.mxu0 0.0
    %133 = vmatpush1.msra.mxu0 0.0
    %134 = vmatprep.subr.mxu0 0.0
    %135 = vmatpush1.msra.mxu0 0.0
    %136 = vmatprep.subr.mxu0 0.0
    %137 = vmatpush1.msra.mxu0 0.0
    %138 = vmatprep.subr.mxu0 0.0
    %139 = vmatpush1.msra.mxu0 0.0
    %140 = vmatprep.subr.mxu0 0.0
    %141 = vmatpush1.msra.mxu0 0.0
    %142 = vmatprep.subr.mxu0 0.0
    %143 = vmatpush1.msra.mxu0 0.0
    %144 = vmatprep.subr.mxu0 0.0
    %145 = vmatpush1.msra.mxu0 0.0
    %146 = vmatprep.subr.mxu0 0.0
    %147 = vmatpush1.msra.mxu0 0.0
    %148 = vmatprep.subr.mxu0 0.0
    %149 = vmatpush1.msra.mxu0 0.0
    %150 = vmatprep.subr.mxu0 0.0
    %151 = vmatpush1.msra.mxu0 0.0
    %152 = vmatprep.subr.mxu0 0.0
    %153 = vmatpush1.msra.mxu0 0.0
    %154 = vmatprep.subr.mxu0 0.0
    %155 = vmatpush1.msra.mxu0 0.0
    %156 = vmatprep.subr.mxu0 0.0
    %157 = vmatpush1.msra.mxu0 0.0
    %158 = vmatprep.subr.mxu0 0.0
    %159 = vmatpush1.msra.mxu0 0.0
    %160 = vmatprep.subr.mxu0 0.0
    %161 = vmatpush1.msra.mxu0 0.0
    %162 = vmatprep.subr.mxu0 0.0
    %163 = vmatpush1.msra.mxu0 0.0
    %164 = vmatprep.mubr.f32.mxu0 0.0
    %165 = vmatmul.mubr.f32.gmra.mrb[0].mxu0 %v95
    %v166 = vpop.f32.mrb[0].mxu0
    %v167 = vadd.f32 %v91, %v166
    %v168 = vpop.f32.mrb[0].mxu0
    %169 = vmatprep.mubr.f32.mxu0 0.0
    %170 = vmatmul.mubr.f32.gmra.mrb[0].mxu0 %v98
    %v171 = vpop.f32.mrb[0].mxu0
    %v172 = vadd.f32 %v91, %v171
    %v173 = vpop.f32.mrb[0].mxu0
    %174 = vdwg.mxu0
    %s175 = scalar_lea.vmem [#allocation8], 32
    %v176 = vld [vmem:[%s175] sm:$0xff]
    %v177 = vld [vmem:[%s175 + $0x8] sm:$0xff]
    %v178 = vld [vmem:[%s175 + $0x10] sm:$0xff]
    %v179 = vld [vmem:[%s175 + $0x18] sm:$0xff]
    %s180 = scalar_lea.vmem %s4, 1
    %v181 = vld [vmem:[%s180] sm:$0x1]
    %v183 = vlaneseq
    %v184 = vshrl.u32 %v183, 7
    %v185 = vsub.s32 0, %v184
    %v186 = vrot.slane %v181, %v185
    %v189 = vsel %vm93, %v78, 0
    %v192 = vsel %vm93, %v79, 0
    %194 = vmatprep.subr.mxu0 0.0
    %195 = vmatpush1.msra.mxu0 %v176
    %196 = vmatprep.subr.mxu0 0.0
    %197 = vmatpush1.msra.mxu0 %v177
    %198 = vmatprep.subr.mxu0 0.0
    %199 = vmatpush1.msra.mxu0 %v178
    %200 = vmatprep.subr.mxu0 0.0
    %201 = vmatpush1.msra.mxu0 %v179
    %202 = vmatprep.subr.mxu0 0.0
    %203 = vmatpush1.msra.mxu0 0.0
    %204 = vmatprep.subr.mxu0 0.0
    %205 = vmatpush1.msra.mxu0 0.0
    %206 = vmatprep.subr.mxu0 0.0
    %207 = vmatpush1.msra.mxu0 0.0
    %208 = vmatprep.subr.mxu0 0.0
    %209 = vmatpush1.msra.mxu0 0.0
    %210 = vmatprep.subr.mxu0 0.0
    %211 = vmatpush1.msra.mxu0 0.0
    %212 = vmatprep.subr.mxu0 0.0
    %213 = vmatpush1.msra.mxu0 0.0
    %214 = vmatprep.subr.mxu0 0.0
    %215 = vmatpush1.msra.mxu0 0.0
    %216 = vmatprep.subr.mxu0 0.0
    %217 = vmatpush1.msra.mxu0 0.0
    %218 = vmatprep.subr.mxu0 0.0
    %219 = vmatpush1.msra.mxu0 0.0
    %220 = vmatprep.subr.mxu0 0.0
    %221 = vmatpush1.msra.mxu0 0.0
    %222 = vmatprep.subr.mxu0 0.0
    %223 = vmatpush1.msra.mxu0 0.0
    %224 = vmatprep.subr.mxu0 0.0
    %225 = vmatpush1.msra.mxu0 0.0
    %226 = vmatprep.subr.mxu0 0.0
    %227 = vmatpush1.msra.mxu0 0.0
    %228 = vmatprep.subr.mxu0 0.0
    %229 = vmatpush1.msra.mxu0 0.0
    %230 = vmatprep.subr.mxu0 0.0
    %231 = vmatpush1.msra.mxu0 0.0
    %232 = vmatprep.subr.mxu0 0.0
    %233 = vmatpush1.msra.mxu0 0.0
    %234 = vmatprep.subr.mxu0 0.0
    %235 = vmatpush1.msra.mxu0 0.0
    %236 = vmatprep.subr.mxu0 0.0
    %237 = vmatpush1.msra.mxu0 0.0
    %238 = vmatprep.subr.mxu0 0.0
    %239 = vmatpush1.msra.mxu0 0.0
    %240 = vmatprep.subr.mxu0 0.0
    %241 = vmatpush1.msra.mxu0 0.0
    %242 = vmatprep.subr.mxu0 0.0
    %243 = vmatpush1.msra.mxu0 0.0
    %244 = vmatprep.subr.mxu0 0.0
    %245 = vmatpush1.msra.mxu0 0.0
    %246 = vmatprep.subr.mxu0 0.0
    %247 = vmatpush1.msra.mxu0 0.0
    %248 = vmatprep.subr.mxu0 0.0
    %249 = vmatpush1.msra.mxu0 0.0
    %250 = vmatprep.subr.mxu0 0.0
    %251 = vmatpush1.msra.mxu0 0.0
    %252 = vmatprep.subr.mxu0 0.0
    %253 = vmatpush1.msra.mxu0 0.0
    %254 = vmatprep.subr.mxu0 0.0
    %255 = vmatpush1.msra.mxu0 0.0
    %256 = vmatprep.subr.mxu0 0.0
    %257 = vmatpush1.msra.mxu0 0.0
    %258 = vmatprep.mubr.f32.mxu0 0.0
    %259 = vmatmul.mubr.f32.gmra.mrb[0].mxu0 %v189
    %v260 = vpop.f32.mrb[0].mxu0
    %v261 = vadd.f32 %v186, %v260
    %v262 = vpop.f32.mrb[0].mxu0
    %263 = vmatprep.mubr.f32.mxu0 0.0
    %264 = vmatmul.mubr.f32.gmra.mrb[0].mxu0 %v192
    %v265 = vpop.f32.mrb[0].mxu0
    %v266 = vadd.f32 %v186, %v265
    %v267 = vpop.f32.mrb[0].mxu0
    %268 = vdwg.mxu0
    %s269 = scalar_lea.vmem [#allocation8], 64
    %v270 = vld [vmem:[%s269] sm:$0xff]
    %v271 = vld [vmem:[%s269 + $0x8] sm:$0xff]
    %v272 = vld [vmem:[%s269 + $0x10] sm:$0xff]
    %v273 = vld [vmem:[%s269 + $0x18] sm:$0xff]
    %s274 = scalar_lea.vmem %s4, 2
    %v275 = vld [vmem:[%s274] sm:$0x1]
    %v277 = vlaneseq
    %v278 = vshrl.u32 %v277, 7
    %v279 = vsub.s32 0, %v278
    %v280 = vrot.slane %v275, %v279
    %v283 = vsel %vm93, %v80, 0
    %v286 = vsel %vm93, %v81, 0
    %288 = vmatprep.subr.mxu0 0.0
    %289 = vmatpush1.msra.mxu0 %v270
    %290 = vmatprep.subr.mxu0 0.0
    %291 = vmatpush1.msra.mxu0 %v271
    %292 = vmatprep.subr.mxu0 0.0
    %293 = vmatpush1.msra.mxu0 %v272
    %294 = vmatprep.subr.mxu0 0.0
    %295 = vmatpush1.msra.mxu0 %v273
    %296 = vmatprep.subr.mxu0 0.0
    %297 = vmatpush1.msra.mxu0 0.0
    %298 = vmatprep.subr.mxu0 0.0
    %299 = vmatpush1.msra.mxu0 0.0
    %300 = vmatprep.subr.mxu0 0.0
    %301 = vmatpush1.msra.mxu0 0.0
    %302 = vmatprep.subr.mxu0 0.0
    %303 = vmatpush1.msra.mxu0 0.0
    %304 = vmatprep.subr.mxu0 0.0
    %305 = vmatpush1.msra.mxu0 0.0
    %306 = vmatprep.subr.mxu0 0.0
    %307 = vmatpush1.msra.mxu0 0.0
    %308 = vmatprep.subr.mxu0 0.0
    %309 = vmatpush1.msra.mxu0 0.0
    %310 = vmatprep.subr.mxu0 0.0
    %311 = vmatpush1.msra.mxu0 0.0
    %312 = vmatprep.subr.mxu0 0.0
    %313 = vmatpush1.msra.mxu0 0.0
    %314 = vmatprep.subr.mxu0 0.0
    %315 = vmatpush1.msra.mxu0 0.0
    %316 = vmatprep.subr.mxu0 0.0
    %317 = vmatpush1.msra.mxu0 0.0
    %318 = vmatprep.subr.mxu0 0.0
    %319 = vmatpush1.msra.mxu0 0.0
    %320 = vmatprep.subr.mxu0 0.0
    %321 = vmatpush1.msra.mxu0 0.0
    %322 = vmatprep.subr.mxu0 0.0
    %323 = vmatpush1.msra.mxu0 0.0
    %324 = vmatprep.subr.mxu0 0.0
    %325 = vmatpush1.msra.mxu0 0.0
    %326 = vmatprep.subr.mxu0 0.0
    %327 = vmatpush1.msra.mxu0 0.0
    %328 = vmatprep.subr.mxu0 0.0
    %329 = vmatpush1.msra.mxu0 0.0
    %330 = vmatprep.subr.mxu0 0.0
    %331 = vmatpush1.msra.mxu0 0.0
    %332 = vmatprep.subr.mxu0 0.0
    %333 = vmatpush1.msra.mxu0 0.0
    %334 = vmatprep.subr.mxu0 0.0
    %335 = vmatpush1.msra.mxu0 0.0
    %336 = vmatprep.subr.mxu0 0.0
    %337 = vmatpush1.msra.mxu0 0.0
    %338 = vmatprep.subr.mxu0 0.0
    %339 = vmatpush1.msra.mxu0 0.0
    %340 = vmatprep.subr.mxu0 0.0
    %341 = vmatpush1.msra.mxu0 0.0
    %342 = vmatprep.subr.mxu0 0.0
    %343 = vmatpush1.msra.mxu0 0.0
    %344 = vmatprep.subr.mxu0 0.0
    %345 = vmatpush1.msra.mxu0 0.0
    %346 = vmatprep.subr.mxu0 0.0
    %347 = vmatpush1.msra.mxu0 0.0
    %348 = vmatprep.subr.mxu0 0.0
    %349 = vmatpush1.msra.mxu0 0.0
    %350 = vmatprep.subr.mxu0 0.0
    %351 = vmatpush1.msra.mxu0 0.0
    %352 = vmatprep.mubr.f32.mxu0 0.0
    %353 = vmatmul.mubr.f32.gmra.mrb[0].mxu0 %v283
    %v354 = vpop.f32.mrb[0].mxu0
    %v355 = vadd.f32 %v280, %v354
    %v356 = vpop.f32.mrb[0].mxu0
    %357 = vmatprep.mubr.f32.mxu0 0.0
    %358 = vmatmul.mubr.f32.gmra.mrb[0].mxu0 %v286
    %v359 = vpop.f32.mrb[0].mxu0
    %v360 = vadd.f32 %v280, %v359
    %v361 = vpop.f32.mrb[0].mxu0
    %362 = vdwg.mxu0
    %vm363 = vcmask 64512
    %v365 = vsel %vm363, %v167, 0
    %v368 = vsel %vm363, %v261, 0
    %370 = vmatprep.subr.mxu0 0.0
    %371 = vmatpush1.xpose.msra.mxu0 %v368
    %372 = vmatprep.subr.mxu0 0.0
    %373 = vmatpush1.xpose.msra.mxu0 0.0
    %374 = vmatprep.subr.mxu0 0.0
    %375 = vmatpush1.xpose.msra.mxu0 0.0
    %376 = vmatprep.subr.mxu0 0.0
    %377 = vmatpush1.xpose.msra.mxu0 0.0
    %378 = vmatprep.subr.mxu0 0.0
    %379 = vmatpush1.xpose.msra.mxu0 0.0
    %380 = vmatprep.subr.mxu0 0.0
    %381 = vmatpush1.xpose.msra.mxu0 0.0
    %382 = vmatprep.subr.mxu0 0.0
    %383 = vmatpush1.xpose.msra.mxu0 0.0
    %384 = vmatprep.subr.mxu0 0.0
    %385 = vmatpush1.xpose.msra.mxu0 0.0
    %386 = vmatprep.subr.mxu0 0.0
    %387 = vmatpush1.xpose.msra.mxu0 0.0
    %388 = vmatprep.subr.mxu0 0.0
    %389 = vmatpush1.xpose.msra.mxu0 0.0
    %390 = vmatprep.subr.mxu0 0.0
    %391 = vmatpush1.xpose.msra.mxu0 0.0
    %392 = vmatprep.subr.mxu0 0.0
    %393 = vmatpush1.xpose.msra.mxu0 0.0
    %394 = vmatprep.subr.mxu0 0.0
    %395 = vmatpush1.xpose.msra.mxu0 0.0
    %396 = vmatprep.subr.mxu0 0.0
    %397 = vmatpush1.xpose.msra.mxu0 0.0
    %398 = vmatprep.subr.mxu0 0.0
    %399 = vmatpush1.xpose.msra.mxu0 0.0
    %400 = vmatprep.subr.mxu0 0.0
    %401 = vmatpush1.xpose.msra.mxu0 0.0
    %402 = vmatprep.subr.mxu0 0.0
    %403 = vmatpush1.xpose.msra.mxu0 0.0
    %404 = vmatprep.subr.mxu0 0.0
    %405 = vmatpush1.xpose.msra.mxu0 0.0
    %406 = vmatprep.subr.mxu0 0.0
    %407 = vmatpush1.xpose.msra.mxu0 0.0
    %408 = vmatprep.subr.mxu0 0.0
    %409 = vmatpush1.xpose.msra.mxu0 0.0
    %410 = vmatprep.subr.mxu0 0.0
    %411 = vmatpush1.xpose.msra.mxu0 0.0
    %412 = vmatprep.subr.mxu0 0.0
    %413 = vmatpush1.xpose.msra.mxu0 0.0
    %414 = vmatprep.subr.mxu0 0.0
    %415 = vmatpush1.xpose.msra.mxu0 0.0
    %416 = vmatprep.subr.mxu0 0.0
    %417 = vmatpush1.xpose.msra.mxu0 0.0
    %418 = vmatprep.subr.mxu0 0.0
    %419 = vmatpush1.xpose.msra.mxu0 0.0
    %420 = vmatprep.subr.mxu0 0.0
    %421 = vmatpush1.xpose.msra.mxu0 0.0
    %422 = vmatprep.subr.mxu0 0.0
    %423 = vmatpush1.xpose.msra.mxu0 0.0
    %424 = vmatprep.subr.mxu0 0.0
    %425 = vmatpush1.xpose.msra.mxu0 0.0
    %426 = vmatprep.subr.mxu0 0.0
    %427 = vmatpush1.xpose.msra.mxu0 0.0
    %428 = vmatprep.subr.mxu0 0.0
    %429 = vmatpush1.xpose.msra.mxu0 0.0
    %430 = vmatprep.subr.mxu0 0.0
    %431 = vmatpush1.xpose.msra.mxu0 0.0
    %432 = vmatprep.subr.mxu0 0.0
    %433 = vmatpush1.xpose.msra.mxu0 0.0
    %434 = vmatprep.mubr.f32.mxu0 0.0
    %435 = vmatmul.mubr.f32.gmra.mrb[0].mxu0 %v365
    %v436 = vpop.f32.mrb[0].mxu0
    %v437 = vadd.f32 0.0, %v436
    %v438 = vpop.f32.mrb[0].mxu0
    %439 = vdwg.mxu0
    %v441 = vsel %vm363, %v172, 0
    %v444 = vsel %vm363, %v266, 0
    %446 = vmatprep.subr.mxu0 0.0
    %447 = vmatpush1.xpose.msra.mxu0 %v444
    %448 = vmatprep.subr.mxu0 0.0
    %449 = vmatpush1.xpose.msra.mxu0 0.0
    %450 = vmatprep.subr.mxu0 0.0
    %451 = vmatpush1.xpose.msra.mxu0 0.0
    %452 = vmatprep.subr.mxu0 0.0
    %453 = vmatpush1.xpose.msra.mxu0 0.0
    %454 = vmatprep.subr.mxu0 0.0
    %455 = vmatpush1.xpose.msra.mxu0 0.0
    %456 = vmatprep.subr.mxu0 0.0
    %457 = vmatpush1.xpose.msra.mxu0 0.0
    %458 = vmatprep.subr.mxu0 0.0
    %459 = vmatpush1.xpose.msra.mxu0 0.0
    %460 = vmatprep.subr.mxu0 0.0
    %461 = vmatpush1.xpose.msra.mxu0 0.0
    %462 = vmatprep.subr.mxu0 0.0
    %463 = vmatpush1.xpose.msra.mxu0 0.0
    %464 = vmatprep.subr.mxu0 0.0
    %465 = vmatpush1.xpose.msra.mxu0 0.0
    %466 = vmatprep.subr.mxu0 0.0
    %467 = vmatpush1.xpose.msra.mxu0 0.0
    %468 = vmatprep.subr.mxu0 0.0
    %469 = vmatpush1.xpose.msra.mxu0 0.0
    %470 = vmatprep.subr.mxu0 0.0
    %471 = vmatpush1.xpose.msra.mxu0 0.0
    %472 = vmatprep.subr.mxu0 0.0
    %473 = vmatpush1.xpose.msra.mxu0 0.0
    %474 = vmatprep.subr.mxu0 0.0
    %475 = vmatpush1.xpose.msra.mxu0 0.0
    %476 = vmatprep.subr.mxu0 0.0
    %477 = vmatpush1.xpose.msra.mxu0 0.0
    %478 = vmatprep.subr.mxu0 0.0
    %479 = vmatpush1.xpose.msra.mxu0 0.0
    %480 = vmatprep.subr.mxu0 0.0
    %481 = vmatpush1.xpose.msra.mxu0 0.0
    %482 = vmatprep.subr.mxu0 0.0
    %483 = vmatpush1.xpose.msra.mxu0 0.0
    %484 = vmatprep.subr.mxu0 0.0
    %485 = vmatpush1.xpose.msra.mxu0 0.0
    %486 = vmatprep.subr.mxu0 0.0
    %487 = vmatpush1.xpose.msra.mxu0 0.0
    %488 = vmatprep.subr.mxu0 0.0
    %489 = vmatpush1.xpose.msra.mxu0 0.0
    %490 = vmatprep.subr.mxu0 0.0
    %491 = vmatpush1.xpose.msra.mxu0 0.0
    %492 = vmatprep.subr.mxu0 0.0
    %493 = vmatpush1.xpose.msra.mxu0 0.0
    %494 = vmatprep.subr.mxu0 0.0
    %495 = vmatpush1.xpose.msra.mxu0 0.0
    %496 = vmatprep.subr.mxu0 0.0
    %497 = vmatpush1.xpose.msra.mxu0 0.0
    %498 = vmatprep.subr.mxu0 0.0
    %499 = vmatpush1.xpose.msra.mxu0 0.0
    %500 = vmatprep.subr.mxu0 0.0
    %501 = vmatpush1.xpose.msra.mxu0 0.0
    %502 = vmatprep.subr.mxu0 0.0
    %503 = vmatpush1.xpose.msra.mxu0 0.0
    %504 = vmatprep.subr.mxu0 0.0
    %505 = vmatpush1.xpose.msra.mxu0 0.0
    %506 = vmatprep.subr.mxu0 0.0
    %507 = vmatpush1.xpose.msra.mxu0 0.0
    %508 = vmatprep.subr.mxu0 0.0
    %509 = vmatpush1.xpose.msra.mxu0 0.0
    %510 = vmatprep.mubr.f32.mxu0 0.0
    %511 = vmatmul.mubr.f32.gmra.mrb[0].mxu0 %v441
    %v512 = vpop.f32.mrb[0].mxu0
    %v513 = vadd.f32 0.0, %v512
    %v514 = vpop.f32.mrb[0].mxu0
    %515 = vdwg.mxu0
    %v516 = vmul.f32 %v437, 0.35355338
    %v517 = vmul.f32 %v513, 0.35355338
    %v518 = vsel %vm363, %v516, -inf
    %519 = vmax.xlane.f32.xlu0 %v518
    %v520 = vpop.xlane.xlu0 %519
    %v521 = vsel %vm363, %v517, -inf
    %522 = vmax.xlane.f32.xlu0 %v521
    %v523 = vpop.xlane.xlu0 %522
    %v524 = vsub.f32 %v516, %v520
    %v525 = vsub.f32 %v517, %v523
    %v526 = vmul.f32 %v524, 1.442695
    %v527 = vpow.pop %v526
    %v528 = vmul.f32 %v525, 1.442695
    %v529 = vpow.pop %v528
    %v530 = vsel %vm363, %v527, 0.0
    %531 = vadd.xlane.f32.xlu0 %v530
    %v532 = vpop.xlane.xlu0 %531
    %v533 = vsel %vm363, %v529, 0.0
    %534 = vadd.xlane.f32.xlu0 %v533
    %v535 = vpop.xlane.xlu0 %534
    %v536 = vrcp.pop %v532
    %v537 = vrcp.pop %v535
    %v538 = vmul.f32 %v527, %v536
    %v539 = vmul.f32 %v529, %v537
    %v541 = vsel %vm363, %v538, 0
    %543 = vmatprep.subr.mxu0 0.0
    %544 = vmatpush1.msra.mxu0 %v355
    %545 = vmatprep.subr.mxu0 0.0
    %546 = vmatpush1.msra.mxu0 0.0
    %547 = vmatprep.subr.mxu0 0.0
    %548 = vmatpush1.msra.mxu0 0.0
    %549 = vmatprep.subr.mxu0 0.0
    %550 = vmatpush1.msra.mxu0 0.0
    %551 = vmatprep.subr.mxu0 0.0
    %552 = vmatpush1.msra.mxu0 0.0
    %553 = vmatprep.subr.mxu0 0.0
    %554 = vmatpush1.msra.mxu0 0.0
    %555 = vmatprep.subr.mxu0 0.0
    %556 = vmatpush1.msra.mxu0 0.0
    %557 = vmatprep.subr.mxu0 0.0
    %558 = vmatpush1.msra.mxu0 0.0
    %559 = vmatprep.subr.mxu0 0.0
    %560 = vmatpush1.msra.mxu0 0.0
    %561 = vmatprep.subr.mxu0 0.0
    %562 = vmatpush1.msra.mxu0 0.0
    %563 = vmatprep.subr.mxu0 0.0
    %564 = vmatpush1.msra.mxu0 0.0
    %565 = vmatprep.subr.mxu0 0.0
    %566 = vmatpush1.msra.mxu0 0.0
    %567 = vmatprep.subr.mxu0 0.0
    %568 = vmatpush1.msra.mxu0 0.0
    %569 = vmatprep.subr.mxu0 0.0
    %570 = vmatpush1.msra.mxu0 0.0
    %571 = vmatprep.subr.mxu0 0.0
    %572 = vmatpush1.msra.mxu0 0.0
    %573 = vmatprep.subr.mxu0 0.0
    %574 = vmatpush1.msra.mxu0 0.0
    %575 = vmatprep.subr.mxu0 0.0
    %576 = vmatpush1.msra.mxu0 0.0
    %577 = vmatprep.subr.mxu0 0.0
    %578 = vmatpush1.msra.mxu0 0.0
    %579 = vmatprep.subr.mxu0 0.0
    %580 = vmatpush1.msra.mxu0 0.0
    %581 = vmatprep.subr.mxu0 0.0
    %582 = vmatpush1.msra.mxu0 0.0
    %583 = vmatprep.subr.mxu0 0.0
    %584 = vmatpush1.msra.mxu0 0.0
    %585 = vmatprep.subr.mxu0 0.0
    %586 = vmatpush1.msra.mxu0 0.0
    %587 = vmatprep.subr.mxu0 0.0
    %588 = vmatpush1.msra.mxu0 0.0
    %589 = vmatprep.subr.mxu0 0.0
    %590 = vmatpush1.msra.mxu0 0.0
    %591 = vmatprep.subr.mxu0 0.0
    %592 = vmatpush1.msra.mxu0 0.0
    %593 = vmatprep.subr.mxu0 0.0
    %594 = vmatpush1.msra.mxu0 0.0
    %595 = vmatprep.subr.mxu0 0.0
    %596 = vmatpush1.msra.mxu0 0.0
    %597 = vmatprep.subr.mxu0 0.0
    %598 = vmatpush1.msra.mxu0 0.0
    %599 = vmatprep.subr.mxu0 0.0
    %600 = vmatpush1.msra.mxu0 0.0
    %601 = vmatprep.subr.mxu0 0.0
    %602 = vmatpush1.msra.mxu0 0.0
    %603 = vmatprep.subr.mxu0 0.0
    %604 = vmatpush1.msra.mxu0 0.0
    %605 = vmatprep.subr.mxu0 0.0
    %606 = vmatpush1.msra.mxu0 0.0
    %607 = vmatprep.mubr.f32.mxu0 0.0
    %608 = vmatmul.mubr.f32.gmra.mrb[0].mxu0 %v541
    %v609 = vpop.f32.mrb[0].mxu0
    %v610 = vadd.f32 0.0, %v609
    %v611 = vpop.f32.mrb[0].mxu0
    %612 = vdwg.mxu0
    %v614 = vsel %vm363, %v539, 0
    %616 = vmatprep.subr.mxu0 0.0
    %617 = vmatpush1.msra.mxu0 %v360
    %618 = vmatprep.subr.mxu0 0.0
    %619 = vmatpush1.msra.mxu0 0.0
    %620 = vmatprep.subr.mxu0 0.0
    %621 = vmatpush1.msra.mxu0 0.0
    %622 = vmatprep.subr.mxu0 0.0
    %623 = vmatpush1.msra.mxu0 0.0
    %624 = vmatprep.subr.mxu0 0.0
    %625 = vmatpush1.msra.mxu0 0.0
    %626 = vmatprep.subr.mxu0 0.0
    %627 = vmatpush1.msra.mxu0 0.0
    %628 = vmatprep.subr.mxu0 0.0
    %629 = vmatpush1.msra.mxu0 0.0
    %630 = vmatprep.subr.mxu0 0.0
    %631 = vmatpush1.msra.mxu0 0.0
    %632 = vmatprep.subr.mxu0 0.0
    %633 = vmatpush1.msra.mxu0 0.0
    %634 = vmatprep.subr.mxu0 0.0
    %635 = vmatpush1.msra.mxu0 0.0
    %636 = vmatprep.subr.mxu0 0.0
    %637 = vmatpush1.msra.mxu0 0.0
    %638 = vmatprep.subr.mxu0 0.0
    %639 = vmatpush1.msra.mxu0 0.0
    %640 = vmatprep.subr.mxu0 0.0
    %641 = vmatpush1.msra.mxu0 0.0
    %642 = vmatprep.subr.mxu0 0.0
    %643 = vmatpush1.msra.mxu0 0.0
    %644 = vmatprep.subr.mxu0 0.0
    %645 = vmatpush1.msra.mxu0 0.0
    %646 = vmatprep.subr.mxu0 0.0
    %647 = vmatpush1.msra.mxu0 0.0
    %648 = vmatprep.subr.mxu0 0.0
    %649 = vmatpush1.msra.mxu0 0.0
    %650 = vmatprep.subr.mxu0 0.0
    %651 = vmatpush1.msra.mxu0 0.0
    %652 = vmatprep.subr.mxu0 0.0
    %653 = vmatpush1.msra.mxu0 0.0
    %654 = vmatprep.subr.mxu0 0.0
    %655 = vmatpush1.msra.mxu0 0.0
    %656 = vmatprep.subr.mxu0 0.0
    %657 = vmatpush1.msra.mxu0 0.0
    %658 = vmatprep.subr.mxu0 0.0
    %659 = vmatpush1.msra.mxu0 0.0
    %660 = vmatprep.subr.mxu0 0.0
    %661 = vmatpush1.msra.mxu0 0.0
    %662 = vmatprep.subr.mxu0 0.0
    %663 = vmatpush1.msra.mxu0 0.0
    %664 = vmatprep.subr.mxu0 0.0
    %665 = vmatpush1.msra.mxu0 0.0
    %666 = vmatprep.subr.mxu0 0.0
    %667 = vmatpush1.msra.mxu0 0.0
    %668 = vmatprep.subr.mxu0 0.0
    %669 = vmatpush1.msra.mxu0 0.0
    %670 = vmatprep.subr.mxu0 0.0
    %671 = vmatpush1.msra.mxu0 0.0
    %672 = vmatprep.subr.mxu0 0.0
    %673 = vmatpush1.msra.mxu0 0.0
    %674 = vmatprep.subr.mxu0 0.0
    %675 = vmatpush1.msra.mxu0 0.0
    %676 = vmatprep.subr.mxu0 0.0
    %677 = vmatpush1.msra.mxu0 0.0
    %678 = vmatprep.subr.mxu0 0.0
    %679 = vmatpush1.msra.mxu0 0.0
    %680 = vmatprep.mubr.f32.mxu0 0.0
    %681 = vmatmul.mubr.f32.gmra.mrb[0].mxu0 %v614
    %v682 = vpop.f32.mrb[0].mxu0
    %v683 = vadd.f32 0.0, %v682
    %v684 = vpop.f32.mrb[0].mxu0
    %685 = vdwg.mxu0
    %686 = vrot.lane.b32.xlu0 %v167, 120
    %v687 = vpop.permute.xlu0 %686
    %688 = vrot.lane.b32.xlu0 %v261, 120
    %v689 = vpop.permute.xlu0 %688
    %v690 = vsel %vm363, %v687, 0
    %v692 = vsel %vm363, %v689, 0
    %694 = vmatprep.subr.mxu0 0.0
    %695 = vmatpush1.xpose.msra.mxu0 %v692
    %696 = vmatprep.subr.mxu0 0.0
    %697 = vmatpush1.xpose.msra.mxu0 0.0
    %698 = vmatprep.subr.mxu0 0.0
    %699 = vmatpush1.xpose.msra.mxu0 0.0
    %700 = vmatprep.subr.mxu0 0.0
    %701 = vmatpush1.xpose.msra.mxu0 0.0
    %702 = vmatprep.subr.mxu0 0.0
    %703 = vmatpush1.xpose.msra.mxu0 0.0
    %704 = vmatprep.subr.mxu0 0.0
    %705 = vmatpush1.xpose.msra.mxu0 0.0
    %706 = vmatprep.subr.mxu0 0.0
    %707 = vmatpush1.xpose.msra.mxu0 0.0
    %708 = vmatprep.subr.mxu0 0.0
    %709 = vmatpush1.xpose.msra.mxu0 0.0
    %710 = vmatprep.subr.mxu0 0.0
    %711 = vmatpush1.xpose.msra.mxu0 0.0
    %712 = vmatprep.subr.mxu0 0.0
    %713 = vmatpush1.xpose.msra.mxu0 0.0
    %714 = vmatprep.subr.mxu0 0.0
    %715 = vmatpush1.xpose.msra.mxu0 0.0
    %716 = vmatprep.subr.mxu0 0.0
    %717 = vmatpush1.xpose.msra.mxu0 0.0
    %718 = vmatprep.subr.mxu0 0.0
    %719 = vmatpush1.xpose.msra.mxu0 0.0
    %720 = vmatprep.subr.mxu0 0.0
    %721 = vmatpush1.xpose.msra.mxu0 0.0
    %722 = vmatprep.subr.mxu0 0.0
    %723 = vmatpush1.xpose.msra.mxu0 0.0
    %724 = vmatprep.subr.mxu0 0.0
    %725 = vmatpush1.xpose.msra.mxu0 0.0
    %726 = vmatprep.subr.mxu0 0.0
    %727 = vmatpush1.xpose.msra.mxu0 0.0
    %728 = vmatprep.subr.mxu0 0.0
    %729 = vmatpush1.xpose.msra.mxu0 0.0
    %730 = vmatprep.subr.mxu0 0.0
    %731 = vmatpush1.xpose.msra.mxu0 0.0
    %732 = vmatprep.subr.mxu0 0.0
    %733 = vmatpush1.xpose.msra.mxu0 0.0
    %734 = vmatprep.subr.mxu0 0.0
    %735 = vmatpush1.xpose.msra.mxu0 0.0
    %736 = vmatprep.subr.mxu0 0.0
    %737 = vmatpush1.xpose.msra.mxu0 0.0
    %738 = vmatprep.subr.mxu0 0.0
    %739 = vmatpush1.xpose.msra.mxu0 0.0
    %740 = vmatprep.subr.mxu0 0.0
    %741 = vmatpush1.xpose.msra.mxu0 0.0
    %742 = vmatprep.subr.mxu0 0.0
    %743 = vmatpush1.xpose.msra.mxu0 0.0
    %744 = vmatprep.subr.mxu0 0.0
    %745 = vmatpush1.xpose.msra.mxu0 0.0
    %746 = vmatprep.subr.mxu0 0.0
    %747 = vmatpush1.xpose.msra.mxu0 0.0
    %748 = vmatprep.subr.mxu0 0.0
    %749 = vmatpush1.xpose.msra.mxu0 0.0
    %750 = vmatprep.subr.mxu0 0.0
    %751 = vmatpush1.xpose.msra.mxu0 0.0
    %752 = vmatprep.subr.mxu0 0.0
    %753 = vmatpush1.xpose.msra.mxu0 0.0
    %754 = vmatprep.subr.mxu0 0.0
    %755 = vmatpush1.xpose.msra.mxu0 0.0
    %756 = vmatprep.subr.mxu0 0.0
    %757 = vmatpush1.xpose.msra.mxu0 0.0
    %758 = vmatprep.mubr.f32.mxu0 0.0
    %759 = vmatmul.mubr.f32.gmra.mrb[0].mxu0 %v690
    %v760 = vpop.f32.mrb[0].mxu0
    %v761 = vadd.f32 0.0, %v760
    %v762 = vpop.f32.mrb[0].mxu0
    %763 = vdwg.mxu0
    %764 = vrot.lane.b32.xlu0 %v172, 120
    %v765 = vpop.permute.xlu0 %764
    %766 = vrot.lane.b32.xlu0 %v266, 120
    %v767 = vpop.permute.xlu0 %766
    %v768 = vsel %vm363, %v765, 0
    %v770 = vsel %vm363, %v767, 0
    %772 = vmatprep.subr.mxu0 0.0
    %773 = vmatpush1.xpose.msra.mxu0 %v770
    %774 = vmatprep.subr.mxu0 0.0
    %775 = vmatpush1.xpose.msra.mxu0 0.0
    %776 = vmatprep.subr.mxu0 0.0
    %777 = vmatpush1.xpose.msra.mxu0 0.0
    %778 = vmatprep.subr.mxu0 0.0
    %779 = vmatpush1.xpose.msra.mxu0 0.0
    %780 = vmatprep.subr.mxu0 0.0
    %781 = vmatpush1.xpose.msra.mxu0 0.0
    %782 = vmatprep.subr.mxu0 0.0
    %783 = vmatpush1.xpose.msra.mxu0 0.0
    %784 = vmatprep.subr.mxu0 0.0
    %785 = vmatpush1.xpose.msra.mxu0 0.0
    %786 = vmatprep.subr.mxu0 0.0
    %787 = vmatpush1.xpose.msra.mxu0 0.0
    %788 = vmatprep.subr.mxu0 0.0
    %789 = vmatpush1.xpose.msra.mxu0 0.0
    %790 = vmatprep.subr.mxu0 0.0
    %791 = vmatpush1.xpose.msra.mxu0 0.0
    %792 = vmatprep.subr.mxu0 0.0
    %793 = vmatpush1.xpose.msra.mxu0 0.0
    %794 = vmatprep.subr.mxu0 0.0
    %795 = vmatpush1.xpose.msra.mxu0 0.0
    %796 = vmatprep.subr.mxu0 0.0
    %797 = vmatpush1.xpose.msra.mxu0 0.0
    %798 = vmatprep.subr.mxu0 0.0
    %799 = vmatpush1.xpose.msra.mxu0 0.0
    %800 = vmatprep.subr.mxu0 0.0
    %801 = vmatpush1.xpose.msra.mxu0 0.0
    %802 = vmatprep.subr.mxu0 0.0
    %803 = vmatpush1.xpose.msra.mxu0 0.0
    %804 = vmatprep.subr.mxu0 0.0
    %805 = vmatpush1.xpose.msra.mxu0 0.0
    %806 = vmatprep.subr.mxu0 0.0
    %807 = vmatpush1.xpose.msra.mxu0 0.0
    %808 = vmatprep.subr.mxu0 0.0
    %809 = vmatpush1.xpose.msra.mxu0 0.0
    %810 = vmatprep.subr.mxu0 0.0
    %811 = vmatpush1.xpose.msra.mxu0 0.0
    %812 = vmatprep.subr.mxu0 0.0
    %813 = vmatpush1.xpose.msra.mxu0 0.0
    %814 = vmatprep.subr.mxu0 0.0
    %815 = vmatpush1.xpose.msra.mxu0 0.0
    %816 = vmatprep.subr.mxu0 0.0
    %817 = vmatpush1.xpose.msra.mxu0 0.0
    %818 = vmatprep.subr.mxu0 0.0
    %819 = vmatpush1.xpose.msra.mxu0 0.0
    %820 = vmatprep.subr.mxu0 0.0
    %821 = vmatpush1.xpose.msra.mxu0 0.0
    %822 = vmatprep.subr.mxu0 0.0
    %823 = vmatpush1.xpose.msra.mxu0 0.0
    %824 = vmatprep.subr.mxu0 0.0
    %825 = vmatpush1.xpose.msra.mxu0 0.0
    %826 = vmatprep.subr.mxu0 0.0
    %827 = vmatpush1.xpose.msra.mxu0 0.0
    %828 = vmatprep.subr.mxu0 0.0
    %829 = vmatpush1.xpose.msra.mxu0 0.0
    %830 = vmatprep.subr.mxu0 0.0
    %831 = vmatpush1.xpose.msra.mxu0 0.0
    %832 = vmatprep.subr.mxu0 0.0
    %833 = vmatpush1.xpose.msra.mxu0 0.0
    %834 = vmatprep.subr.mxu0 0.0
    %835 = vmatpush1.xpose.msra.mxu0 0.0
    %836 = vmatprep.mubr.f32.mxu0 0.0
    %837 = vmatmul.mubr.f32.gmra.mrb[0].mxu0 %v768
    %v838 = vpop.f32.mrb[0].mxu0
    %v839 = vadd.f32 0.0, %v838
    %v840 = vpop.f32.mrb[0].mxu0
    %841 = vdwg.mxu0
    %v842 = vmul.f32 %v761, 0.35355338
    %v843 = vmul.f32 %v839, 0.35355338
    %v844 = vsel %vm363, %v842, -inf
    %845 = vmax.xlane.f32.xlu0 %v844
    %v846 = vpop.xlane.xlu0 %845
    %v847 = vsel %vm363, %v843, -inf
    %848 = vmax.xlane.f32.xlu0 %v847
    %v849 = vpop.xlane.xlu0 %848
    %v850 = vsub.f32 %v842, %v846
    %v851 = vsub.f32 %v843, %v849
    %v852 = vmul.f32 %v850, 1.442695
    %v853 = vpow.pop %v852
    %v854 = vmul.f32 %v851, 1.442695
    %v855 = vpow.pop %v854
    %v856 = vsel %vm363, %v853, 0.0
    %857 = vadd.xlane.f32.xlu0 %v856
    %v858 = vpop.xlane.xlu0 %857
    %v859 = vsel %vm363, %v855, 0.0
    %860 = vadd.xlane.f32.xlu0 %v859
    %v861 = vpop.xlane.xlu0 %860
    %v862 = vrcp.pop %v858
    %v863 = vrcp.pop %v861
    %v864 = vmul.f32 %v853, %v862
    %v865 = vmul.f32 %v855, %v863
    %867 = vrot.lane.b32.xlu0 %v355, 120
    %v868 = vpop.permute.xlu0 %867
    %v871 = vsel %vm363, %v864, 0
    %873 = vmatprep.subr.mxu0 0.0
    %874 = vmatpush1.msra.mxu0 %v868
    %875 = vmatprep.subr.mxu0 0.0
    %876 = vmatpush1.msra.mxu0 0.0
    %877 = vmatprep.subr.mxu0 0.0
    %878 = vmatpush1.msra.mxu0 0.0
    %879 = vmatprep.subr.mxu0 0.0
    %880 = vmatpush1.msra.mxu0 0.0
    %881 = vmatprep.subr.mxu0 0.0
    %882 = vmatpush1.msra.mxu0 0.0
    %883 = vmatprep.subr.mxu0 0.0
    %884 = vmatpush1.msra.mxu0 0.0
    %885 = vmatprep.subr.mxu0 0.0
    %886 = vmatpush1.msra.mxu0 0.0
    %887 = vmatprep.subr.mxu0 0.0
    %888 = vmatpush1.msra.mxu0 0.0
    %889 = vmatprep.subr.mxu0 0.0
    %890 = vmatpush1.msra.mxu0 0.0
    %891 = vmatprep.subr.mxu0 0.0
    %892 = vmatpush1.msra.mxu0 0.0
    %893 = vmatprep.subr.mxu0 0.0
    %894 = vmatpush1.msra.mxu0 0.0
    %895 = vmatprep.subr.mxu0 0.0
    %896 = vmatpush1.msra.mxu0 0.0
    %897 = vmatprep.subr.mxu0 0.0
    %898 = vmatpush1.msra.mxu0 0.0
    %899 = vmatprep.subr.mxu0 0.0
    %900 = vmatpush1.msra.mxu0 0.0
    %901 = vmatprep.subr.mxu0 0.0
    %902 = vmatpush1.msra.mxu0 0.0
    %903 = vmatprep.subr.mxu0 0.0
    %904 = vmatpush1.msra.mxu0 0.0
    %905 = vmatprep.subr.mxu0 0.0
    %906 = vmatpush1.msra.mxu0 0.0
    %907 = vmatprep.subr.mxu0 0.0
    %908 = vmatpush1.msra.mxu0 0.0
    %909 = vmatprep.subr.mxu0 0.0
    %910 = vmatpush1.msra.mxu0 0.0
    %911 = vmatprep.subr.mxu0 0.0
    %912 = vmatpush1.msra.mxu0 0.0
    %913 = vmatprep.subr.mxu0 0.0
    %914 = vmatpush1.msra.mxu0 0.0
    %915 = vmatprep.subr.mxu0 0.0
    %916 = vmatpush1.msra.mxu0 0.0
    %917 = vmatprep.subr.mxu0 0.0
    %918 = vmatpush1.msra.mxu0 0.0
    %919 = vmatprep.subr.mxu0 0.0
    %920 = vmatpush1.msra.mxu0 0.0
    %921 = vmatprep.subr.mxu0 0.0
    %922 = vmatpush1.msra.mxu0 0.0
    %923 = vmatprep.subr.mxu0 0.0
    %924 = vmatpush1.msra.mxu0 0.0
    %925 = vmatprep.subr.mxu0 0.0
    %926 = vmatpush1.msra.mxu0 0.0
    %927 = vmatprep.subr.mxu0 0.0
    %928 = vmatpush1.msra.mxu0 0.0
    %929 = vmatprep.subr.mxu0 0.0
    %930 = vmatpush1.msra.mxu0 0.0
    %931 = vmatprep.subr.mxu0 0.0
    %932 = vmatpush1.msra.mxu0 0.0
    %933 = vmatprep.subr.mxu0 0.0
    %934 = vmatpush1.msra.mxu0 0.0
    %935 = vmatprep.subr.mxu0 0.0
    %936 = vmatpush1.msra.mxu0 0.0
    %937 = vmatprep.mubr.f32.mxu0 0.0
    %938 = vmatmul.mubr.f32.gmra.mrb[0].mxu0 %v871
    %v939 = vpop.f32.mrb[0].mxu0
    %v940 = vadd.f32 0.0, %v939
    %v941 = vpop.f32.mrb[0].mxu0
    %942 = vdwg.mxu0
    %944 = vrot.lane.b32.xlu0 %v360, 120
    %v945 = vpop.permute.xlu0 %944
    %v948 = vsel %vm363, %v865, 0
    %950 = vmatprep.subr.mxu0 0.0
    %951 = vmatpush1.msra.mxu0 %v945
    %952 = vmatprep.subr.mxu0 0.0
    %953 = vmatpush1.msra.mxu0 0.0
    %954 = vmatprep.subr.mxu0 0.0
    %955 = vmatpush1.msra.mxu0 0.0
    %956 = vmatprep.subr.mxu0 0.0
    %957 = vmatpush1.msra.mxu0 0.0
    %958 = vmatprep.subr.mxu0 0.0
    %959 = vmatpush1.msra.mxu0 0.0
    %960 = vmatprep.subr.mxu0 0.0
    %961 = vmatpush1.msra.mxu0 0.0
    %962 = vmatprep.subr.mxu0 0.0
    %963 = vmatpush1.msra.mxu0 0.0
    %964 = vmatprep.subr.mxu0 0.0
    %965 = vmatpush1.msra.mxu0 0.0
    %966 = vmatprep.subr.mxu0 0.0
    %967 = vmatpush1.msra.mxu0 0.0
    %968 = vmatprep.subr.mxu0 0.0
    %969 = vmatpush1.msra.mxu0 0.0
    %970 = vmatprep.subr.mxu0 0.0
    %971 = vmatpush1.msra.mxu0 0.0
    %972 = vmatprep.subr.mxu0 0.0
    %973 = vmatpush1.msra.mxu0 0.0
    %974 = vmatprep.subr.mxu0 0.0
    %975 = vmatpush1.msra.mxu0 0.0
    %976 = vmatprep.subr.mxu0 0.0
    %977 = vmatpush1.msra.mxu0 0.0
    %978 = vmatprep.subr.mxu0 0.0
    %979 = vmatpush1.msra.mxu0 0.0
    %980 = vmatprep.subr.mxu0 0.0
    %981 = vmatpush1.msra.mxu0 0.0
    %982 = vmatprep.subr.mxu0 0.0
    %983 = vmatpush1.msra.mxu0 0.0
    %984 = vmatprep.subr.mxu0 0.0
    %985 = vmatpush1.msra.mxu0 0.0
    %986 = vmatprep.subr.mxu0 0.0
    %987 = vmatpush1.msra.mxu0 0.0
    %988 = vmatprep.subr.mxu0 0.0
    %989 = vmatpush1.msra.mxu0 0.0
    %990 = vmatprep.subr.mxu0 0.0
    %991 = vmatpush1.msra.mxu0 0.0
    %992 = vmatprep.subr.mxu0 0.0
    %993 = vmatpush1.msra.mxu0 0.0
    %994 = vmatprep.subr.mxu0 0.0
    %995 = vmatpush1.msra.mxu0 0.0
    %996 = vmatprep.subr.mxu0 0.0
    %997 = vmatpush1.msra.mxu0 0.0
    %998 = vmatprep.subr.mxu0 0.0
    %999 = vmatpush1.msra.mxu0 0.0
    %1000 = vmatprep.subr.mxu0 0.0
    %1001 = vmatpush1.msra.mxu0 0.0
    %1002 = vmatprep.subr.mxu0 0.0
    %1003 = vmatpush1.msra.mxu0 0.0
    %1004 = vmatprep.subr.mxu0 0.0
    %1005 = vmatpush1.msra.mxu0 0.0
    %1006 = vmatprep.subr.mxu0 0.0
    %1007 = vmatpush1.msra.mxu0 0.0
    %1008 = vmatprep.subr.mxu0 0.0
    %1009 = vmatpush1.msra.mxu0 0.0
    %1010 = vmatprep.subr.mxu0 0.0
    %1011 = vmatpush1.msra.mxu0 0.0
    %1012 = vmatprep.subr.mxu0 0.0
    %1013 = vmatpush1.msra.mxu0 0.0
    %1014 = vmatprep.mubr.f32.mxu0 0.0
    %1015 = vmatmul.mubr.f32.gmra.mrb[0].mxu0 %v948
    %v1016 = vpop.f32.mrb[0].mxu0
    %v1017 = vadd.f32 0.0, %v1016
    %v1018 = vpop.f32.mrb[0].mxu0
    %1019 = vdwg.mxu0
    %1020 = vrot.lane.b32.xlu0 %v167, 112
    %v1021 = vpop.permute.xlu0 %1020
    %1022 = vrot.lane.b32.xlu0 %v261, 112
    %v1023 = vpop.permute.xlu0 %1022
    %v1024 = vsel %vm363, %v1021, 0
    %v1026 = vsel %vm363, %v1023, 0
    %1028 = vmatprep.subr.mxu0 0.0
    %1029 = vmatpush1.xpose.msra.mxu0 %v1026
    %1030 = vmatprep.subr.mxu0 0.0
    %1031 = vmatpush1.xpose.msra.mxu0 0.0
    %1032 = vmatprep.subr.mxu0 0.0
    %1033 = vmatpush1.xpose.msra.mxu0 0.0
    %1034 = vmatprep.subr.mxu0 0.0
    %1035 = vmatpush1.xpose.msra.mxu0 0.0
    %1036 = vmatprep.subr.mxu0 0.0
    %1037 = vmatpush1.xpose.msra.mxu0 0.0
    %1038 = vmatprep.subr.mxu0 0.0
    %1039 = vmatpush1.xpose.msra.mxu0 0.0
    %1040 = vmatprep.subr.mxu0 0.0
    %1041 = vmatpush1.xpose.msra.mxu0 0.0
    %1042 = vmatprep.subr.mxu0 0.0
    %1043 = vmatpush1.xpose.msra.mxu0 0.0
    %1044 = vmatprep.subr.mxu0 0.0
    %1045 = vmatpush1.xpose.msra.mxu0 0.0
    %1046 = vmatprep.subr.mxu0 0.0
    %1047 = vmatpush1.xpose.msra.mxu0 0.0
    %1048 = vmatprep.subr.mxu0 0.0
    %1049 = vmatpush1.xpose.msra.mxu0 0.0
    %1050 = vmatprep.subr.mxu0 0.0
    %1051 = vmatpush1.xpose.msra.mxu0 0.0
    %1052 = vmatprep.subr.mxu0 0.0
    %1053 = vmatpush1.xpose.msra.mxu0 0.0
    %1054 = vmatprep.subr.mxu0 0.0
    %1055 = vmatpush1.xpose.msra.mxu0 0.0
    %1056 = vmatprep.subr.mxu0 0.0
    %1057 = vmatpush1.xpose.msra.mxu0 0.0
    %1058 = vmatprep.subr.mxu0 0.0
    %1059 = vmatpush1.xpose.msra.mxu0 0.0
    %1060 = vmatprep.subr.mxu0 0.0
    %1061 = vmatpush1.xpose.msra.mxu0 0.0
    %1062 = vmatprep.subr.mxu0 0.0
    %1063 = vmatpush1.xpose.msra.mxu0 0.0
    %1064 = vmatprep.subr.mxu0 0.0
    %1065 = vmatpush1.xpose.msra.mxu0 0.0
    %1066 = vmatprep.subr.mxu0 0.0
    %1067 = vmatpush1.xpose.msra.mxu0 0.0
    %1068 = vmatprep.subr.mxu0 0.0
    %1069 = vmatpush1.xpose.msra.mxu0 0.0
    %1070 = vmatprep.subr.mxu0 0.0
    %1071 = vmatpush1.xpose.msra.mxu0 0.0
    %1072 = vmatprep.subr.mxu0 0.0
    %1073 = vmatpush1.xpose.msra.mxu0 0.0
    %1074 = vmatprep.subr.mxu0 0.0
    %1075 = vmatpush1.xpose.msra.mxu0 0.0
    %1076 = vmatprep.subr.mxu0 0.0
    %1077 = vmatpush1.xpose.msra.mxu0 0.0
    %1078 = vmatprep.subr.mxu0 0.0
    %1079 = vmatpush1.xpose.msra.mxu0 0.0
    %1080 = vmatprep.subr.mxu0 0.0
    %1081 = vmatpush1.xpose.msra.mxu0 0.0
    %1082 = vmatprep.subr.mxu0 0.0
    %1083 = vmatpush1.xpose.msra.mxu0 0.0
    %1084 = vmatprep.subr.mxu0 0.0
    %1085 = vmatpush1.xpose.msra.mxu0 0.0
    %1086 = vmatprep.subr.mxu0 0.0
    %1087 = vmatpush1.xpose.msra.mxu0 0.0
    %1088 = vmatprep.subr.mxu0 0.0
    %1089 = vmatpush1.xpose.msra.mxu0 0.0
    %1090 = vmatprep.subr.mxu0 0.0
    %1091 = vmatpush1.xpose.msra.mxu0 0.0
    %1092 = vmatprep.mubr.f32.mxu0 0.0
    %1093 = vmatmul.mubr.f32.gmra.mrb[0].mxu0 %v1024
    %v1094 = vpop.f32.mrb[0].mxu0
    %v1095 = vadd.f32 0.0, %v1094
    %v1096 = vpop.f32.mrb[0].mxu0
    %1097 = vdwg.mxu0
    %1098 = vrot.lane.b32.xlu0 %v172, 112
    %v1099 = vpop.permute.xlu0 %1098
    %1100 = vrot.lane.b32.xlu0 %v266, 112
    %v1101 = vpop.permute.xlu0 %1100
    %v1102 = vsel %vm363, %v1099, 0
    %v1104 = vsel %vm363, %v1101, 0
    %1106 = vmatprep.subr.mxu0 0.0
    %1107 = vmatpush1.xpose.msra.mxu0 %v1104
    %1108 = vmatprep.subr.mxu0 0.0
    %1109 = vmatpush1.xpose.msra.mxu0 0.0
    %1110 = vmatprep.subr.mxu0 0.0
    %1111 = vmatpush1.xpose.msra.mxu0 0.0
    %1112 = vmatprep.subr.mxu0 0.0
    %1113 = vmatpush1.xpose.msra.mxu0 0.0
    %1114 = vmatprep.subr.mxu0 0.0
    %1115 = vmatpush1.xpose.msra.mxu0 0.0
    %1116 = vmatprep.subr.mxu0 0.0
    %1117 = vmatpush1.xpose.msra.mxu0 0.0
    %1118 = vmatprep.subr.mxu0 0.0
    %1119 = vmatpush1.xpose.msra.mxu0 0.0
    %1120 = vmatprep.subr.mxu0 0.0
    %1121 = vmatpush1.xpose.msra.mxu0 0.0
    %1122 = vmatprep.subr.mxu0 0.0
    %1123 = vmatpush1.xpose.msra.mxu0 0.0
    %1124 = vmatprep.subr.mxu0 0.0
    %1125 = vmatpush1.xpose.msra.mxu0 0.0
    %1126 = vmatprep.subr.mxu0 0.0
    %1127 = vmatpush1.xpose.msra.mxu0 0.0
    %1128 = vmatprep.subr.mxu0 0.0
    %1129 = vmatpush1.xpose.msra.mxu0 0.0
    %1130 = vmatprep.subr.mxu0 0.0
    %1131 = vmatpush1.xpose.msra.mxu0 0.0
    %1132 = vmatprep.subr.mxu0 0.0
    %1133 = vmatpush1.xpose.msra.mxu0 0.0
    %1134 = vmatprep.subr.mxu0 0.0
    %1135 = vmatpush1.xpose.msra.mxu0 0.0
    %1136 = vmatprep.subr.mxu0 0.0
    %1137 = vmatpush1.xpose.msra.mxu0 0.0
    %1138 = vmatprep.subr.mxu0 0.0
    %1139 = vmatpush1.xpose.msra.mxu0 0.0
    %1140 = vmatprep.subr.mxu0 0.0
    %1141 = vmatpush1.xpose.msra.mxu0 0.0
    %1142 = vmatprep.subr.mxu0 0.0
    %1143 = vmatpush1.xpose.msra.mxu0 0.0
    %1144 = vmatprep.subr.mxu0 0.0
    %1145 = vmatpush1.xpose.msra.mxu0 0.0
    %1146 = vmatprep.subr.mxu0 0.0
    %1147 = vmatpush1.xpose.msra.mxu0 0.0
    %1148 = vmatprep.subr.mxu0 0.0
    %1149 = vmatpush1.xpose.msra.mxu0 0.0
    %1150 = vmatprep.subr.mxu0 0.0
    %1151 = vmatpush1.xpose.msra.mxu0 0.0
    %1152 = vmatprep.subr.mxu0 0.0
    %1153 = vmatpush1.xpose.msra.mxu0 0.0
    %1154 = vmatprep.subr.mxu0 0.0
    %1155 = vmatpush1.xpose.msra.mxu0 0.0
    %1156 = vmatprep.subr.mxu0 0.0
    %1157 = vmatpush1.xpose.msra.mxu0 0.0
    %1158 = vmatprep.subr.mxu0 0.0
    %1159 = vmatpush1.xpose.msra.mxu0 0.0
    %1160 = vmatprep.subr.mxu0 0.0
    %1161 = vmatpush1.xpose.msra.mxu0 0.0
    %1162 = vmatprep.subr.mxu0 0.0
    %1163 = vmatpush1.xpose.msra.mxu0 0.0
    %1164 = vmatprep.subr.mxu0 0.0
    %1165 = vmatpush1.xpose.msra.mxu0 0.0
    %1166 = vmatprep.subr.mxu0 0.0
    %1167 = vmatpush1.xpose.msra.mxu0 0.0
    %1168 = vmatprep.subr.mxu0 0.0
    %1169 = vmatpush1.xpose.msra.mxu0 0.0
    %1170 = vmatprep.mubr.f32.mxu0 0.0
    %1171 = vmatmul.mubr.f32.gmra.mrb[0].mxu0 %v1102
    %v1172 = vpop.f32.mrb[0].mxu0
    %v1173 = vadd.f32 0.0, %v1172
    %v1174 = vpop.f32.mrb[0].mxu0
    %1175 = vdwg.mxu0
    %v1176 = vmul.f32 %v1095, 0.35355338
    %v1177 = vmul.f32 %v1173, 0.35355338
    %v1178 = vsel %vm363, %v1176, -inf
    %1179 = vmax.xlane.f32.xlu0 %v1178
    %v1180 = vpop.xlane.xlu0 %1179
    %v1181 = vsel %vm363, %v1177, -inf
    %1182 = vmax.xlane.f32.xlu0 %v1181
    %v1183 = vpop.xlane.xlu0 %1182
    %v1184 = vsub.f32 %v1176, %v1180
    %v1185 = vsub.f32 %v1177, %v1183
    %v1186 = vmul.f32 %v1184, 1.442695
    %v1187 = vpow.pop %v1186
    %v1188 = vmul.f32 %v1185, 1.442695
    %v1189 = vpow.pop %v1188
    %v1190 = vsel %vm363, %v1187, 0.0
    %1191 = vadd.xlane.f32.xlu0 %v1190
    %v1192 = vpop.xlane.xlu0 %1191
    %v1193 = vsel %vm363, %v1189, 0.0
    %1194 = vadd.xlane.f32.xlu0 %v1193
    %v1195 = vpop.xlane.xlu0 %1194
    %v1196 = vrcp.pop %v1192
    %v1197 = vrcp.pop %v1195
    %v1198 = vmul.f32 %v1187, %v1196
    %v1199 = vmul.f32 %v1189, %v1197
    %1200 = vrot.lane.b32.xlu0 %v355, 112
    %v1201 = vpop.permute.xlu0 %1200
    %v1204 = vsel %vm363, %v1198, 0
    %1206 = vmatprep.subr.mxu0 0.0
    %1207 = vmatpush1.msra.mxu0 %v1201
    %1208 = vmatprep.subr.mxu0 0.0
    %1209 = vmatpush1.msra.mxu0 0.0
    %1210 = vmatprep.subr.mxu0 0.0
    %1211 = vmatpush1.msra.mxu0 0.0
    %1212 = vmatprep.subr.mxu0 0.0
    %1213 = vmatpush1.msra.mxu0 0.0
    %1214 = vmatprep.subr.mxu0 0.0
    %1215 = vmatpush1.msra.mxu0 0.0
    %1216 = vmatprep.subr.mxu0 0.0
    %1217 = vmatpush1.msra.mxu0 0.0
    %1218 = vmatprep.subr.mxu0 0.0
    %1219 = vmatpush1.msra.mxu0 0.0
    %1220 = vmatprep.subr.mxu0 0.0
    %1221 = vmatpush1.msra.mxu0 0.0
    %1222 = vmatprep.subr.mxu0 0.0
    %1223 = vmatpush1.msra.mxu0 0.0
    %1224 = vmatprep.subr.mxu0 0.0
    %1225 = vmatpush1.msra.mxu0 0.0
    %1226 = vmatprep.subr.mxu0 0.0
    %1227 = vmatpush1.msra.mxu0 0.0
    %1228 = vmatprep.subr.mxu0 0.0
    %1229 = vmatpush1.msra.mxu0 0.0
    %1230 = vmatprep.subr.mxu0 0.0
    %1231 = vmatpush1.msra.mxu0 0.0
    %1232 = vmatprep.subr.mxu0 0.0
    %1233 = vmatpush1.msra.mxu0 0.0
    %1234 = vmatprep.subr.mxu0 0.0
    %1235 = vmatpush1.msra.mxu0 0.0
    %1236 = vmatprep.subr.mxu0 0.0
    %1237 = vmatpush1.msra.mxu0 0.0
    %1238 = vmatprep.subr.mxu0 0.0
    %1239 = vmatpush1.msra.mxu0 0.0
    %1240 = vmatprep.subr.mxu0 0.0
    %1241 = vmatpush1.msra.mxu0 0.0
    %1242 = vmatprep.subr.mxu0 0.0
    %1243 = vmatpush1.msra.mxu0 0.0
    %1244 = vmatprep.subr.mxu0 0.0
    %1245 = vmatpush1.msra.mxu0 0.0
    %1246 = vmatprep.subr.mxu0 0.0
    %1247 = vmatpush1.msra.mxu0 0.0
    %1248 = vmatprep.subr.mxu0 0.0
    %1249 = vmatpush1.msra.mxu0 0.0
    %1250 = vmatprep.subr.mxu0 0.0
    %1251 = vmatpush1.msra.mxu0 0.0
    %1252 = vmatprep.subr.mxu0 0.0
    %1253 = vmatpush1.msra.mxu0 0.0
    %1254 = vmatprep.subr.mxu0 0.0
    %1255 = vmatpush1.msra.mxu0 0.0
    %1256 = vmatprep.subr.mxu0 0.0
    %1257 = vmatpush1.msra.mxu0 0.0
    %1258 = vmatprep.subr.mxu0 0.0
    %1259 = vmatpush1.msra.mxu0 0.0
    %1260 = vmatprep.subr.mxu0 0.0
    %1261 = vmatpush1.msra.mxu0 0.0
    %1262 = vmatprep.subr.mxu0 0.0
    %1263 = vmatpush1.msra.mxu0 0.0
    %1264 = vmatprep.subr.mxu0 0.0
    %1265 = vmatpush1.msra.mxu0 0.0
    %1266 = vmatprep.subr.mxu0 0.0
    %1267 = vmatpush1.msra.mxu0 0.0
    %1268 = vmatprep.subr.mxu0 0.0
    %1269 = vmatpush1.msra.mxu0 0.0
    %1270 = vmatprep.mubr.f32.mxu0 0.0
    %1271 = vmatmul.mubr.f32.gmra.mrb[0].mxu0 %v1204
    %v1272 = vpop.f32.mrb[0].mxu0
    %v1273 = vadd.f32 0.0, %v1272
    %v1274 = vpop.f32.mrb[0].mxu0
    %1275 = vdwg.mxu0
    %1276 = vrot.lane.b32.xlu0 %v360, 112
    %v1277 = vpop.permute.xlu0 %1276
    %v1280 = vsel %vm363, %v1199, 0
    %1282 = vmatprep.subr.mxu0 0.0
    %1283 = vmatpush1.msra.mxu0 %v1277
    %1284 = vmatprep.subr.mxu0 0.0
    %1285 = vmatpush1.msra.mxu0 0.0
    %1286 = vmatprep.subr.mxu0 0.0
    %1287 = vmatpush1.msra.mxu0 0.0
    %1288 = vmatprep.subr.mxu0 0.0
    %1289 = vmatpush1.msra.mxu0 0.0
    %1290 = vmatprep.subr.mxu0 0.0
    %1291 = vmatpush1.msra.mxu0 0.0
    %1292 = vmatprep.subr.mxu0 0.0
    %1293 = vmatpush1.msra.mxu0 0.0
    %1294 = vmatprep.subr.mxu0 0.0
    %1295 = vmatpush1.msra.mxu0 0.0
    %1296 = vmatprep.subr.mxu0 0.0
    %1297 = vmatpush1.msra.mxu0 0.0
    %1298 = vmatprep.subr.mxu0 0.0
    %1299 = vmatpush1.msra.mxu0 0.0
    %1300 = vmatprep.subr.mxu0 0.0
    %1301 = vmatpush1.msra.mxu0 0.0
    %1302 = vmatprep.subr.mxu0 0.0
    %1303 = vmatpush1.msra.mxu0 0.0
    %1304 = vmatprep.subr.mxu0 0.0
    %1305 = vmatpush1.msra.mxu0 0.0
    %1306 = vmatprep.subr.mxu0 0.0
    %1307 = vmatpush1.msra.mxu0 0.0
    %1308 = vmatprep.subr.mxu0 0.0
    %1309 = vmatpush1.msra.mxu0 0.0
    %1310 = vmatprep.subr.mxu0 0.0
    %1311 = vmatpush1.msra.mxu0 0.0
    %1312 = vmatprep.subr.mxu0 0.0
    %1313 = vmatpush1.msra.mxu0 0.0
    %1314 = vmatprep.subr.mxu0 0.0
    %1315 = vmatpush1.msra.mxu0 0.0
    %1316 = vmatprep.subr.mxu0 0.0
    %1317 = vmatpush1.msra.mxu0 0.0
    %1318 = vmatprep.subr.mxu0 0.0
    %1319 = vmatpush1.msra.mxu0 0.0
    %1320 = vmatprep.subr.mxu0 0.0
    %1321 = vmatpush1.msra.mxu0 0.0
    %1322 = vmatprep.subr.mxu0 0.0
    %1323 = vmatpush1.msra.mxu0 0.0
    %1324 = vmatprep.subr.mxu0 0.0
    %1325 = vmatpush1.msra.mxu0 0.0
    %1326 = vmatprep.subr.mxu0 0.0
    %1327 = vmatpush1.msra.mxu0 0.0
    %1328 = vmatprep.subr.mxu0 0.0
    %1329 = vmatpush1.msra.mxu0 0.0
    %1330 = vmatprep.subr.mxu0 0.0
    %1331 = vmatpush1.msra.mxu0 0.0
    %1332 = vmatprep.subr.mxu0 0.0
    %1333 = vmatpush1.msra.mxu0 0.0
    %1334 = vmatprep.subr.mxu0 0.0
    %1335 = vmatpush1.msra.mxu0 0.0
    %1336 = vmatprep.subr.mxu0 0.0
    %1337 = vmatpush1.msra.mxu0 0.0
    %1338 = vmatprep.subr.mxu0 0.0
    %1339 = vmatpush1.msra.mxu0 0.0
    %1340 = vmatprep.subr.mxu0 0.0
    %1341 = vmatpush1.msra.mxu0 0.0
    %1342 = vmatprep.subr.mxu0 0.0
    %1343 = vmatpush1.msra.mxu0 0.0
    %1344 = vmatprep.subr.mxu0 0.0
    %1345 = vmatpush1.msra.mxu0 0.0
    %1346 = vmatprep.mubr.f32.mxu0 0.0
    %1347 = vmatmul.mubr.f32.gmra.mrb[0].mxu0 %v1280
    %v1348 = vpop.f32.mrb[0].mxu0
    %v1349 = vadd.f32 0.0, %v1348
    %v1350 = vpop.f32.mrb[0].mxu0
    %1351 = vdwg.mxu0
    %1352 = vrot.lane.b32.xlu0 %v167, 104
    %v1353 = vpop.permute.xlu0 %1352
    %1354 = vrot.lane.b32.xlu0 %v261, 104
    %v1355 = vpop.permute.xlu0 %1354
    %v1356 = vsel %vm363, %v1353, 0
    %v1358 = vsel %vm363, %v1355, 0
    %1360 = vmatprep.subr.mxu0 0.0
    %1361 = vmatpush1.xpose.msra.mxu0 %v1358
    %1362 = vmatprep.subr.mxu0 0.0
    %1363 = vmatpush1.xpose.msra.mxu0 0.0
    %1364 = vmatprep.subr.mxu0 0.0
    %1365 = vmatpush1.xpose.msra.mxu0 0.0
    %1366 = vmatprep.subr.mxu0 0.0
    %1367 = vmatpush1.xpose.msra.mxu0 0.0
    %1368 = vmatprep.subr.mxu0 0.0
    %1369 = vmatpush1.xpose.msra.mxu0 0.0
    %1370 = vmatprep.subr.mxu0 0.0
    %1371 = vmatpush1.xpose.msra.mxu0 0.0
    %1372 = vmatprep.subr.mxu0 0.0
    %1373 = vmatpush1.xpose.msra.mxu0 0.0
    %1374 = vmatprep.subr.mxu0 0.0
    %1375 = vmatpush1.xpose.msra.mxu0 0.0
    %1376 = vmatprep.subr.mxu0 0.0
    %1377 = vmatpush1.xpose.msra.mxu0 0.0
    %1378 = vmatprep.subr.mxu0 0.0
    %1379 = vmatpush1.xpose.msra.mxu0 0.0
    %1380 = vmatprep.subr.mxu0 0.0
    %1381 = vmatpush1.xpose.msra.mxu0 0.0
    %1382 = vmatprep.subr.mxu0 0.0
    %1383 = vmatpush1.xpose.msra.mxu0 0.0
    %1384 = vmatprep.subr.mxu0 0.0
    %1385 = vmatpush1.xpose.msra.mxu0 0.0
    %1386 = vmatprep.subr.mxu0 0.0
    %1387 = vmatpush1.xpose.msra.mxu0 0.0
    %1388 = vmatprep.subr.mxu0 0.0
    %1389 = vmatpush1.xpose.msra.mxu0 0.0
    %1390 = vmatprep.subr.mxu0 0.0
    %1391 = vmatpush1.xpose.msra.mxu0 0.0
    %1392 = vmatprep.subr.mxu0 0.0
    %1393 = vmatpush1.xpose.msra.mxu0 0.0
    %1394 = vmatprep.subr.mxu0 0.0
    %1395 = vmatpush1.xpose.msra.mxu0 0.0
    %1396 = vmatprep.subr.mxu0 0.0
    %1397 = vmatpush1.xpose.msra.mxu0 0.0
    %1398 = vmatprep.subr.mxu0 0.0
    %1399 = vmatpush1.xpose.msra.mxu0 0.0
    %1400 = vmatprep.subr.mxu0 0.0
    %1401 = vmatpush1.xpose.msra.mxu0 0.0
    %1402 = vmatprep.subr.mxu0 0.0
    %1403 = vmatpush1.xpose.msra.mxu0 0.0
    %1404 = vmatprep.subr.mxu0 0.0
    %1405 = vmatpush1.xpose.msra.mxu0 0.0
    %1406 = vmatprep.subr.mxu0 0.0
    %1407 = vmatpush1.xpose.msra.mxu0 0.0
    %1408 = vmatprep.subr.mxu0 0.0
    %1409 = vmatpush1.xpose.msra.mxu0 0.0
    %1410 = vmatprep.subr.mxu0 0.0
    %1411 = vmatpush1.xpose.msra.mxu0 0.0
    %1412 = vmatprep.subr.mxu0 0.0
    %1413 = vmatpush1.xpose.msra.mxu0 0.0
    %1414 = vmatprep.subr.mxu0 0.0
    %1415 = vmatpush1.xpose.msra.mxu0 0.0
    %1416 = vmatprep.subr.mxu0 0.0
    %1417 = vmatpush1.xpose.msra.mxu0 0.0
    %1418 = vmatprep.subr.mxu0 0.0
    %1419 = vmatpush1.xpose.msra.mxu0 0.0
    %1420 = vmatprep.subr.mxu0 0.0
    %1421 = vmatpush1.xpose.msra.mxu0 0.0
    %1422 = vmatprep.subr.mxu0 0.0
    %1423 = vmatpush1.xpose.msra.mxu0 0.0
    %1424 = vmatprep.mubr.f32.mxu0 0.0
    %1425 = vmatmul.mubr.f32.gmra.mrb[0].mxu0 %v1356
    %v1426 = vpop.f32.mrb[0].mxu0
    %v1427 = vadd.f32 0.0, %v1426
    %v1428 = vpop.f32.mrb[0].mxu0
    %1429 = vdwg.mxu0
    %1430 = vrot.lane.b32.xlu0 %v172, 104
    %v1431 = vpop.permute.xlu0 %1430
    %1432 = vrot.lane.b32.xlu0 %v266, 104
    %v1433 = vpop.permute.xlu0 %1432
    %v1434 = vsel %vm363, %v1431, 0
    %v1436 = vsel %vm363, %v1433, 0
    %1438 = vmatprep.subr.mxu0 0.0
    %1439 = vmatpush1.xpose.msra.mxu0 %v1436
    %1440 = vmatprep.subr.mxu0 0.0
    %1441 = vmatpush1.xpose.msra.mxu0 0.0
    %1442 = vmatprep.subr.mxu0 0.0
    %1443 = vmatpush1.xpose.msra.mxu0 0.0
    %1444 = vmatprep.subr.mxu0 0.0
    %1445 = vmatpush1.xpose.msra.mxu0 0.0
    %1446 = vmatprep.subr.mxu0 0.0
    %1447 = vmatpush1.xpose.msra.mxu0 0.0
    %1448 = vmatprep.subr.mxu0 0.0
    %1449 = vmatpush1.xpose.msra.mxu0 0.0
    %1450 = vmatprep.subr.mxu0 0.0
    %1451 = vmatpush1.xpose.msra.mxu0 0.0
    %1452 = vmatprep.subr.mxu0 0.0
    %1453 = vmatpush1.xpose.msra.mxu0 0.0
    %1454 = vmatprep.subr.mxu0 0.0
    %1455 = vmatpush1.xpose.msra.mxu0 0.0
    %1456 = vmatprep.subr.mxu0 0.0
    %1457 = vmatpush1.xpose.msra.mxu0 0.0
    %1458 = vmatprep.subr.mxu0 0.0
    %1459 = vmatpush1.xpose.msra.mxu0 0.0
    %1460 = vmatprep.subr.mxu0 0.0
    %1461 = vmatpush1.xpose.msra.mxu0 0.0
    %1462 = vmatprep.subr.mxu0 0.0
    %1463 = vmatpush1.xpose.msra.mxu0 0.0
    %1464 = vmatprep.subr.mxu0 0.0
    %1465 = vmatpush1.xpose.msra.mxu0 0.0
    %1466 = vmatprep.subr.mxu0 0.0
    %1467 = vmatpush1.xpose.msra.mxu0 0.0
    %1468 = vmatprep.subr.mxu0 0.0
    %1469 = vmatpush1.xpose.msra.mxu0 0.0
    %1470 = vmatprep.subr.mxu0 0.0
    %1471 = vmatpush1.xpose.msra.mxu0 0.0
    %1472 = vmatprep.subr.mxu0 0.0
    %1473 = vmatpush1.xpose.msra.mxu0 0.0
    %1474 = vmatprep.subr.mxu0 0.0
    %1475 = vmatpush1.xpose.msra.mxu0 0.0
    %1476 = vmatprep.subr.mxu0 0.0
    %1477 = vmatpush1.xpose.msra.mxu0 0.0
    %1478 = vmatprep.subr.mxu0 0.0
    %1479 = vmatpush1.xpose.msra.mxu0 0.0
    %1480 = vmatprep.subr.mxu0 0.0
    %1481 = vmatpush1.xpose.msra.mxu0 0.0
    %1482 = vmatprep.subr.mxu0 0.0
    %1483 = vmatpush1.xpose.msra.mxu0 0.0
    %1484 = vmatprep.subr.mxu0 0.0
    %1485 = vmatpush1.xpose.msra.mxu0 0.0
    %1486 = vmatprep.subr.mxu0 0.0
    %1487 = vmatpush1.xpose.msra.mxu0 0.0
    %1488 = vmatprep.subr.mxu0 0.0
    %1489 = vmatpush1.xpose.msra.mxu0 0.0
    %1490 = vmatprep.subr.mxu0 0.0
    %1491 = vmatpush1.xpose.msra.mxu0 0.0
    %1492 = vmatprep.subr.mxu0 0.0
    %1493 = vmatpush1.xpose.msra.mxu0 0.0
    %1494 = vmatprep.subr.mxu0 0.0
    %1495 = vmatpush1.xpose.msra.mxu0 0.0
    %1496 = vmatprep.subr.mxu0 0.0
    %1497 = vmatpush1.xpose.msra.mxu0 0.0
    %1498 = vmatprep.subr.mxu0 0.0
    %1499 = vmatpush1.xpose.msra.mxu0 0.0
    %1500 = vmatprep.subr.mxu0 0.0
    %1501 = vmatpush1.xpose.msra.mxu0 0.0
    %1502 = vmatprep.mubr.f32.mxu0 0.0
    %1503 = vmatmul.mubr.f32.gmra.mrb[0].mxu0 %v1434
    %v1504 = vpop.f32.mrb[0].mxu0
    %v1505 = vadd.f32 0.0, %v1504
    %v1506 = vpop.f32.mrb[0].mxu0
    %1507 = vdwg.mxu0
    %v1508 = vmul.f32 %v1427, 0.35355338
    %v1509 = vmul.f32 %v1505, 0.35355338
    %v1510 = vsel %vm363, %v1508, -inf
    %1511 = vmax.xlane.f32.xlu0 %v1510
    %v1512 = vpop.xlane.xlu0 %1511
    %v1513 = vsel %vm363, %v1509, -inf
    %1514 = vmax.xlane.f32.xlu0 %v1513
    %v1515 = vpop.xlane.xlu0 %1514
    %v1516 = vsub.f32 %v1508, %v1512
    %v1517 = vsub.f32 %v1509, %v1515
    %v1518 = vmul.f32 %v1516, 1.442695
    %v1519 = vpow.pop %v1518
    %v1520 = vmul.f32 %v1517, 1.442695
    %v1521 = vpow.pop %v1520
    %v1522 = vsel %vm363, %v1519, 0.0
    %1523 = vadd.xlane.f32.xlu0 %v1522
    %v1524 = vpop.xlane.xlu0 %1523
    %v1525 = vsel %vm363, %v1521, 0.0
    %1526 = vadd.xlane.f32.xlu0 %v1525
    %v1527 = vpop.xlane.xlu0 %1526
    %v1528 = vrcp.pop %v1524
    %v1529 = vrcp.pop %v1527
    %v1530 = vmul.f32 %v1519, %v1528
    %v1531 = vmul.f32 %v1521, %v1529
    %1532 = vrot.lane.b32.xlu0 %v355, 104
    %v1533 = vpop.permute.xlu0 %1532
    %v1536 = vsel %vm363, %v1530, 0
    %1538 = vmatprep.subr.mxu0 0.0
    %1539 = vmatpush1.msra.mxu0 %v1533
    %1540 = vmatprep.subr.mxu0 0.0
    %1541 = vmatpush1.msra.mxu0 0.0
    %1542 = vmatprep.subr.mxu0 0.0
    %1543 = vmatpush1.msra.mxu0 0.0
    %1544 = vmatprep.subr.mxu0 0.0
    %1545 = vmatpush1.msra.mxu0 0.0
    %1546 = vmatprep.subr.mxu0 0.0
    %1547 = vmatpush1.msra.mxu0 0.0
    %1548 = vmatprep.subr.mxu0 0.0
    %1549 = vmatpush1.msra.mxu0 0.0
    %1550 = vmatprep.subr.mxu0 0.0
    %1551 = vmatpush1.msra.mxu0 0.0
    %1552 = vmatprep.subr.mxu0 0.0
    %1553 = vmatpush1.msra.mxu0 0.0
    %1554 = vmatprep.subr.mxu0 0.0
    %1555 = vmatpush1.msra.mxu0 0.0
    %1556 = vmatprep.subr.mxu0 0.0
    %1557 = vmatpush1.msra.mxu0 0.0
    %1558 = vmatprep.subr.mxu0 0.0
    %1559 = vmatpush1.msra.mxu0 0.0
    %1560 = vmatprep.subr.mxu0 0.0
    %1561 = vmatpush1.msra.mxu0 0.0
    %1562 = vmatprep.subr.mxu0 0.0
    %1563 = vmatpush1.msra.mxu0 0.0
    %1564 = vmatprep.subr.mxu0 0.0
    %1565 = vmatpush1.msra.mxu0 0.0
    %1566 = vmatprep.subr.mxu0 0.0
    %1567 = vmatpush1.msra.mxu0 0.0
    %1568 = vmatprep.subr.mxu0 0.0
    %1569 = vmatpush1.msra.mxu0 0.0
    %1570 = vmatprep.subr.mxu0 0.0
    %1571 = vmatpush1.msra.mxu0 0.0
    %1572 = vmatprep.subr.mxu0 0.0
    %1573 = vmatpush1.msra.mxu0 0.0
    %1574 = vmatprep.subr.mxu0 0.0
    %1575 = vmatpush1.msra.mxu0 0.0
    %1576 = vmatprep.subr.mxu0 0.0
    %1577 = vmatpush1.msra.mxu0 0.0
    %1578 = vmatprep.subr.mxu0 0.0
    %1579 = vmatpush1.msra.mxu0 0.0
    %1580 = vmatprep.subr.mxu0 0.0
    %1581 = vmatpush1.msra.mxu0 0.0
    %1582 = vmatprep.subr.mxu0 0.0
    %1583 = vmatpush1.msra.mxu0 0.0
    %1584 = vmatprep.subr.mxu0 0.0
    %1585 = vmatpush1.msra.mxu0 0.0
    %1586 = vmatprep.subr.mxu0 0.0
    %1587 = vmatpush1.msra.mxu0 0.0
    %1588 = vmatprep.subr.mxu0 0.0
    %1589 = vmatpush1.msra.mxu0 0.0
    %1590 = vmatprep.subr.mxu0 0.0
    %1591 = vmatpush1.msra.mxu0 0.0
    %1592 = vmatprep.subr.mxu0 0.0
    %1593 = vmatpush1.msra.mxu0 0.0
    %1594 = vmatprep.subr.mxu0 0.0
    %1595 = vmatpush1.msra.mxu0 0.0
    %1596 = vmatprep.subr.mxu0 0.0
    %1597 = vmatpush1.msra.mxu0 0.0
    %1598 = vmatprep.subr.mxu0 0.0
    %1599 = vmatpush1.msra.mxu0 0.0
    %1600 = vmatprep.subr.mxu0 0.0
    %1601 = vmatpush1.msra.mxu0 0.0
    %1602 = vmatprep.mubr.f32.mxu0 0.0
    %1603 = vmatmul.mubr.f32.gmra.mrb[0].mxu0 %v1536
    %v1604 = vpop.f32.mrb[0].mxu0
    %v1605 = vadd.f32 0.0, %v1604
    %v1606 = vpop.f32.mrb[0].mxu0
    %1607 = vdwg.mxu0
    %1608 = vrot.lane.b32.xlu0 %v360, 104
    %v1609 = vpop.permute.xlu0 %1608
    %v1612 = vsel %vm363, %v1531, 0
    %1614 = vmatprep.subr.mxu0 0.0
    %1615 = vmatpush1.msra.mxu0 %v1609
    %1616 = vmatprep.subr.mxu0 0.0
    %1617 = vmatpush1.msra.mxu0 0.0
    %1618 = vmatprep.subr.mxu0 0.0
    %1619 = vmatpush1.msra.mxu0 0.0
    %1620 = vmatprep.subr.mxu0 0.0
    %1621 = vmatpush1.msra.mxu0 0.0
    %1622 = vmatprep.subr.mxu0 0.0
    %1623 = vmatpush1.msra.mxu0 0.0
    %1624 = vmatprep.subr.mxu0 0.0
    %1625 = vmatpush1.msra.mxu0 0.0
    %1626 = vmatprep.subr.mxu0 0.0
    %1627 = vmatpush1.msra.mxu0 0.0
    %1628 = vmatprep.subr.mxu0 0.0
    %1629 = vmatpush1.msra.mxu0 0.0
    %1630 = vmatprep.subr.mxu0 0.0
    %1631 = vmatpush1.msra.mxu0 0.0
    %1632 = vmatprep.subr.mxu0 0.0
    %1633 = vmatpush1.msra.mxu0 0.0
    %1634 = vmatprep.subr.mxu0 0.0
    %1635 = vmatpush1.msra.mxu0 0.0
    %1636 = vmatprep.subr.mxu0 0.0
    %1637 = vmatpush1.msra.mxu0 0.0
    %1638 = vmatprep.subr.mxu0 0.0
    %1639 = vmatpush1.msra.mxu0 0.0
    %1640 = vmatprep.subr.mxu0 0.0
    %1641 = vmatpush1.msra.mxu0 0.0
    %1642 = vmatprep.subr.mxu0 0.0
    %1643 = vmatpush1.msra.mxu0 0.0
    %1644 = vmatprep.subr.mxu0 0.0
    %1645 = vmatpush1.msra.mxu0 0.0
    %1646 = vmatprep.subr.mxu0 0.0
    %1647 = vmatpush1.msra.mxu0 0.0
    %1648 = vmatprep.subr.mxu0 0.0
    %1649 = vmatpush1.msra.mxu0 0.0
    %1650 = vmatprep.subr.mxu0 0.0
    %1651 = vmatpush1.msra.mxu0 0.0
    %1652 = vmatprep.subr.mxu0 0.0
    %1653 = vmatpush1.msra.mxu0 0.0
    %1654 = vmatprep.subr.mxu0 0.0
    %1655 = vmatpush1.msra.mxu0 0.0
    %1656 = vmatprep.subr.mxu0 0.0
    %1657 = vmatpush1.msra.mxu0 0.0
    %1658 = vmatprep.subr.mxu0 0.0
    %1659 = vmatpush1.msra.mxu0 0.0
    %1660 = vmatprep.subr.mxu0 0.0
    %1661 = vmatpush1.msra.mxu0 0.0
    %1662 = vmatprep.subr.mxu0 0.0
    %1663 = vmatpush1.msra.mxu0 0.0
    %1664 = vmatprep.subr.mxu0 0.0
    %1665 = vmatpush1.msra.mxu0 0.0
    %1666 = vmatprep.subr.mxu0 0.0
    %1667 = vmatpush1.msra.mxu0 0.0
    %1668 = vmatprep.subr.mxu0 0.0
    %1669 = vmatpush1.msra.mxu0 0.0
    %1670 = vmatprep.subr.mxu0 0.0
    %1671 = vmatpush1.msra.mxu0 0.0
    %1672 = vmatprep.subr.mxu0 0.0
    %1673 = vmatpush1.msra.mxu0 0.0
    %1674 = vmatprep.subr.mxu0 0.0
    %1675 = vmatpush1.msra.mxu0 0.0
    %1676 = vmatprep.subr.mxu0 0.0
    %1677 = vmatpush1.msra.mxu0 0.0
    %1678 = vmatprep.mubr.f32.mxu0 0.0
    %1679 = vmatmul.mubr.f32.gmra.mrb[0].mxu0 %v1612
    %v1680 = vpop.f32.mrb[0].mxu0
    %v1681 = vadd.f32 0.0, %v1680
    %v1682 = vpop.f32.mrb[0].mxu0
    %1683 = vdwg.mxu0
    %1686 = vrot.lane.b32.xlu0 %v940, 8
    %v1687 = vpop.permute.xlu0 %1686
    %1688 = vrot.lane.b32.xlu0 %v1017, 8
    %v1689 = vpop.permute.xlu0 %1688
    %1694 = vrot.lane.b32.xlu0 %v1273, 16
    %v1695 = vpop.permute.xlu0 %1694
    %1696 = vrot.lane.b32.xlu0 %v1349, 16
    %v1697 = vpop.permute.xlu0 %1696
    %1702 = vrot.lane.b32.xlu0 %v1605, 24
    %v1703 = vpop.permute.xlu0 %1702
    %1704 = vrot.lane.b32.xlu0 %v1681, 24
    %v1705 = vpop.permute.xlu0 %1704
    %v1708 = vsel %vm363, %v610, %v1687
    %v1709 = vsel %vm363, %v683, %v1689
    %vm1710 = vcmask 130048
    %v1711 = vsel %vm1710, %v1708, %v1695
    %v1712 = vsel %vm1710, %v1709, %v1697
    %vm1713 = vcmask 195584
    %v1714 = vsel %vm1713, %v1711, %v1703
    %v1715 = vsel %vm1713, %v1712, %v1705
    %s1716 = scalar_lea.vmem [#allocation8], 96
    %v1717 = vld [vmem:[%s1716] sm:$0xff]
    %v1718 = vld [vmem:[%s1716 + $0x8] sm:$0xff]
    %v1719 = vld [vmem:[%s1716 + $0x10] sm:$0xff]
    %v1720 = vld [vmem:[%s1716 + $0x18] sm:$0xff]
    %s1721 = scalar_lea.vmem %s4, 3
    %v1722 = vld [vmem:[%s1721] sm:$0x1]
    %v1724 = vlaneseq
    %v1725 = vshrl.u32 %v1724, 7
    %v1726 = vsub.s32 0, %v1725
    %v1727 = vrot.slane %v1722, %v1726
    %v1730 = vsel %vm93, %v1714, 0
    %v1733 = vsel %vm93, %v1715, 0
    %1735 = vmatprep.subr.mxu0 0.0
    %1736 = vmatpush1.msra.mxu0 %v1717
    %1737 = vmatprep.subr.mxu0 0.0
    %1738 = vmatpush1.msra.mxu0 %v1718
    %1739 = vmatprep.subr.mxu0 0.0
    %1740 = vmatpush1.msra.mxu0 %v1719
    %1741 = vmatprep.subr.mxu0 0.0
    %1742 = vmatpush1.msra.mxu0 %v1720
    %1743 = vmatprep.subr.mxu0 0.0
    %1744 = vmatpush1.msra.mxu0 0.0
    %1745 = vmatprep.subr.mxu0 0.0
    %1746 = vmatpush1.msra.mxu0 0.0
    %1747 = vmatprep.subr.mxu0 0.0
    %1748 = vmatpush1.msra.mxu0 0.0
    %1749 = vmatprep.subr.mxu0 0.0
    %1750 = vmatpush1.msra.mxu0 0.0
    %1751 = vmatprep.subr.mxu0 0.0
    %1752 = vmatpush1.msra.mxu0 0.0
    %1753 = vmatprep.subr.mxu0 0.0
    %1754 = vmatpush1.msra.mxu0 0.0
    %1755 = vmatprep.subr.mxu0 0.0
    %1756 = vmatpush1.msra.mxu0 0.0
    %1757 = vmatprep.subr.mxu0 0.0
    %1758 = vmatpush1.msra.mxu0 0.0
    %1759 = vmatprep.subr.mxu0 0.0
    %1760 = vmatpush1.msra.mxu0 0.0
    %1761 = vmatprep.subr.mxu0 0.0
    %1762 = vmatpush1.msra.mxu0 0.0
    %1763 = vmatprep.subr.mxu0 0.0
    %1764 = vmatpush1.msra.mxu0 0.0
    %1765 = vmatprep.subr.mxu0 0.0
    %1766 = vmatpush1.msra.mxu0 0.0
    %1767 = vmatprep.subr.mxu0 0.0
    %1768 = vmatpush1.msra.mxu0 0.0
    %1769 = vmatprep.subr.mxu0 0.0
    %1770 = vmatpush1.msra.mxu0 0.0
    %1771 = vmatprep.subr.mxu0 0.0
    %1772 = vmatpush1.msra.mxu0 0.0
    %1773 = vmatprep.subr.mxu0 0.0
    %1774 = vmatpush1.msra.mxu0 0.0
    %1775 = vmatprep.subr.mxu0 0.0
    %1776 = vmatpush1.msra.mxu0 0.0
    %1777 = vmatprep.subr.mxu0 0.0
    %1778 = vmatpush1.msra.mxu0 0.0
    %1779 = vmatprep.subr.mxu0 0.0
    %1780 = vmatpush1.msra.mxu0 0.0
    %1781 = vmatprep.subr.mxu0 0.0
    %1782 = vmatpush1.msra.mxu0 0.0
    %1783 = vmatprep.subr.mxu0 0.0
    %1784 = vmatpush1.msra.mxu0 0.0
    %1785 = vmatprep.subr.mxu0 0.0
    %1786 = vmatpush1.msra.mxu0 0.0
    %1787 = vmatprep.subr.mxu0 0.0
    %1788 = vmatpush1.msra.mxu0 0.0
    %1789 = vmatprep.subr.mxu0 0.0
    %1790 = vmatpush1.msra.mxu0 0.0
    %1791 = vmatprep.subr.mxu0 0.0
    %1792 = vmatpush1.msra.mxu0 0.0
    %1793 = vmatprep.subr.mxu0 0.0
    %1794 = vmatpush1.msra.mxu0 0.0
    %1795 = vmatprep.subr.mxu0 0.0
    %1796 = vmatpush1.msra.mxu0 0.0
    %1797 = vmatprep.subr.mxu0 0.0
    %1798 = vmatpush1.msra.mxu0 0.0
    %1799 = vmatprep.mubr.f32.mxu0 0.0
    %1800 = vmatmul.mubr.f32.gmra.mrb[0].mxu0 %v1730
    %v1801 = vpop.f32.mrb[0].mxu0
    %v1802 = vadd.f32 %v1727, %v1801
    %v1803 = vpop.f32.mrb[0].mxu0
    %1804 = vmatprep.mubr.f32.mxu0 0.0
    %1805 = vmatmul.mubr.f32.gmra.mrb[0].mxu0 %v1733
    %v1806 = vpop.f32.mrb[0].mxu0
    %v1807 = vadd.f32 %v1727, %v1806
    %v1808 = vpop.f32.mrb[0].mxu0
    %1809 = vdwg.mxu0
    %1810 = vst.msk [vmem:[#allocation10] sm:$0xff] %vm93, %v1802
    %1811 = vst.msk [vmem:[#allocation10 + $0x8] sm:$0xff] %vm93, %v1807
    // Predicated region
    $region38: #{tpu_custom_call.1} parent=1 // pred_check
      _
    $region39: #{tpu_custom_call.1} parent=1 // pred_check_branch
      %1813 = sbr.rel (0) target = $region41
    $region40: #{tpu_custom_call.1} parent=1 // pred_region
      %s1815 = ssub.s32 256, 256
      %1816 = vsyncadd [#allocation4], %s1815
      %s1817 = sshll.u32 [#allocation10], 4
      %s1818 = int_to_ptr.vmem [resolvable:$true] %s1817
      %1823 = dma.vmem_to_hbm [thread:$0]  %s1818, 256, %s5, [#allocation4], 128, 128, 8
    $region41: #{tpu_custom_call.1} parent=1 // pred_fallthru
      _
    // Predicated region
    $region42: #{tpu_custom_call.1} parent=1 // pred_check
      _
    $region43: #{tpu_custom_call.1} parent=1 // pred_check_branch
      %1825 = sbr.rel (0) target = $region45
    $region44: #{tpu_custom_call.1} parent=1 // pred_region
      %1826 = dma.done [#allocation4], 256
    $region45: #{tpu_custom_call.1} parent=1 // pred_fallthru
      _
    %1827 = vsyncpa [#allocation3], 1
    %1828 = vsyncpa [#allocation6], 1
    %1829 = vsyncpa [#allocation9], 1
    %1830 = vsyncpa [#allocation4], 1

</llo_original>
